<compile_context>
chip_gen: v5e
topology: v5e:2x2
jax: 0.10.0
libtpu: 0.0.40
codegen_flags: <defaults>
</compile_context>

<pallas_src>
import functools

import jax
import jax.numpy as jnp
from jax import lax
from jax.experimental import pallas as pl
from jax.experimental.pallas import tpu as pltpu

# ---- module-consistent (small) shapes -------------------------------------
B = 2                     # batch (number of input texts)
L = 8                     # sequence length after tokenization
H = 64                    # encoder hidden_size (small stand-in for BERT's 768)
NUM_HEADS = 8             # nn.MultiheadAttention(num_heads=8)
HEAD_DIM = H // NUM_HEADS
BL = B * L                # flattened (batch*seq) rows
NHBL = NUM_HEADS * BL     # 128: lane-dense attention slab width
PROJ_HID = 512
PROJ_DIM = 256            # projection_dim default
NUM_POL = 3               # num_political_labels default
CLS_HID = 384             # packed classifier hidden (128+64+64+64=320 -> 3*128)
FUSE_K = CLS_HID + PROJ_DIM   # 640: fused classifier-2 + ideology-axes matmul K
SCORE_SLAB = 128          # lane-dense packed logits/scores slab
OUT_SLAB = PROJ_DIM + SCORE_SLAB   # 384: merged embeddings+scores output
ATTN_SLAB = 128           # lane-dense padded attention-weights slab
SCALE = 1.0 / float(HEAD_DIM) ** 0.5

assert (L & (L - 1)) == 0 and (BL & (BL - 1)) == 0 and (HEAD_DIM & (HEAD_DIM - 1)) == 0
LOG2_L = L.bit_length() - 1
LOG2_BL = BL.bit_length() - 1
LOG2_HD = HEAD_DIM.bit_length() - 1

# score-slab column layout (hard-codes num_political_labels=3 defaults)
POL_OFF, SOC_OFF, ECO_OFF, FOR_OFF, AXES_OFF = 0, 3, 6, 9, 12

# 64-row weight slab (bf16) lane layout: proj_w1 | padded fused wq/wk/wv | wo
PW1_COL = 0               # (64, 512)
QKV_COL = 512             # q at +0, k at +128, v at +256 (each 64 wide)
QKV_W = 3 * 128           # 384
WO_COL = 896              # (64, 64)
W64_W = 960

# f32 bias-slab lane layout (all 128-aligned segment starts)
BQKV_OFF = 0              # 384 (bq at +0, bk at +128, bv at +256)
BO_OFF = 384              # 64
PB1_OFF = 512             # 512
PB2_OFF = 1024            # 256
CB1_OFF = 1280            # 384
B2_OFF = 1664             # 128
SLAB_W = 1792


# ---------------------------------------------------------------------------
# The single fused kernel
# ---------------------------------------------------------------------------
def _fused_forward_kernel(x_ref, mask_ref, w64_ref, pw2_ref, cw1_ref, w2f_ref,
                          bias_ref, out_ref, *rest, with_attn):
    f32 = jnp.float32
    bf16 = jnp.bfloat16
    x = x_ref[...]                                            # (BL, H) f32

    # ---- fused QKV projection: one dense lane-aligned matmul -------------
    qkv = (jnp.dot(x.astype(bf16), w64_ref[:, QKV_COL:QKV_COL + QKV_W],
                   preferred_element_type=f32)
           + bias_ref[:, BQKV_OFF:BQKV_OFF + QKV_W])          # (BL, 384)
    q = qkv[:, 0:H]                                           # (BL, 64)
    k = qkv[:, 128:128 + H]
    v = qkv[:, 256:256 + H]

    # ---- lane-dense 8-head attention: scores slab (BL, NH*BL) ------------
    # Kb[r, n*BL+j] = K[j, r] if r is a head-n feature, else 0  -> S = Q @ Kb
    kt = k.T                                                  # (H, BL)
    kt_tiled = jnp.concatenate([kt] * NUM_HEADS, axis=1)      # (H, NHBL)
    r64 = lax.broadcasted_iota(jnp.int32, (H, NHBL), 0)
    c128 = lax.broadcasted_iota(jnp.int32, (H, NHBL), 1)
    kb = jnp.where((c128 >> LOG2_BL) == (r64 >> LOG2_HD), kt_tiled, 0.0)

    # cross-batch mask (no key-padding mask, matching the PyTorch module)
    qrow = lax.broadcasted_iota(jnp.int32, (BL, NHBL), 0)
    kcol = lax.broadcasted_iota(jnp.int32, (BL, NHBL), 1) & (BL - 1)
    neg = jnp.where((qrow >> LOG2_L) == (kcol >> LOG2_L), 0.0, -1e30)

    s = jnp.dot(q, kb, preferred_element_type=f32) * SCALE + neg     # (BL, NHBL)
    s = s - jnp.max(s, axis=-1, keepdims=True)    # per-row shift: per-head-block safe
    e = jnp.exp(s)

    # per-head-block softmax denominator via one (128,128) block-ones matmul
    br = lax.broadcasted_iota(jnp.int32, (NHBL, NHBL), 0) >> LOG2_BL
    bc = lax.broadcasted_iota(jnp.int32, (NHBL, NHBL), 1) >> LOG2_BL
    blk_ones = jnp.where(br == bc, 1.0, 0.0)
    denom = jnp.dot(e, blk_ones, preferred_element_type=f32)
    p = e * pl.reciprocal(denom, approx=True)                 # (BL, NHBL)

    # Vb[n*BL+j, n*HD+d] = V[j, n*HD+d] -> ctx = P @ Vb, heads lane-concatenated
    v_tiled = jnp.concatenate([v] * NUM_HEADS, axis=0)        # (NHBL, H)
    vr = lax.broadcasted_iota(jnp.int32, (NHBL, H), 0)
    vc = lax.broadcasted_iota(jnp.int32, (NHBL, H), 1)
    vb = jnp.where((vr >> LOG2_BL) == (vc >> LOG2_HD), v_tiled, 0.0)
    ctx = jnp.dot(p, vb, preferred_element_type=f32)          # (BL, H)

    attended = (jnp.dot(ctx.astype(bf16), w64_ref[:, WO_COL:WO_COL + H],
                        preferred_element_type=f32)
                + bias_ref[:, BO_OFF:BO_OFF + H])             # (BL, H)

    if with_attn:   # head-averaged weights via one block-collapse matmul
        ei = lax.broadcasted_iota(jnp.int32, (BL, BL), 0)
        ej = lax.broadcasted_iota(jnp.int32, (BL, BL), 1)
        eye_div = jnp.where(ei == ej, 1.0 / NUM_HEADS, 0.0)   # (BL, BL)
        coll = jnp.concatenate([eye_div] * NUM_HEADS, axis=0) # (NHBL, BL)
        attnw = jnp.dot(p, coll, preferred_element_type=f32)  # (BL, BL)
        rest[0][...] = jnp.concatenate(
            [attnw, jnp.zeros((BL, ATTN_SLAB - BL), f32)], axis=1)

    # ---- masked mean pooling (pool matrix generated in-kernel) -----------
    mrow = jnp.broadcast_to(mask_ref[...], (B, BL))           # (B, BL)
    prow = lax.broadcasted_iota(jnp.int32, (B, BL), 0)
    pcol = lax.broadcasted_iota(jnp.int32, (B, BL), 1) >> LOG2_L
    pool = jnp.where(prow == pcol, mrow, 0.0)
    pooled = (jnp.dot(pool, attended, preferred_element_type=f32)
              / jnp.sum(pool, axis=1, keepdims=True))         # exact divide (B, H)

    # ---- projection head --------------------------------------------------
    h1 = jnp.maximum(
        jnp.dot(pooled.astype(bf16), w64_ref[:, PW1_COL:PW1_COL + PROJ_HID],
                preferred_element_type=f32)
        + bias_ref[:, PB1_OFF:PB1_OFF + PROJ_HID], 0.0)       # (B, 512)
    emb = jnp.tanh(
        jnp.dot(h1.astype(bf16), pw2_ref[...], preferred_element_type=f32)
        + bias_ref[:, PB2_OFF:PB2_OFF + PROJ_DIM])            # (B, 256)

    # ---- fused classifiers + ideology axes --------------------------------
    cls_h = jnp.maximum(
        jnp.dot(emb.astype(bf16), cw1_ref[...], preferred_element_type=f32)
        + bias_ref[:, CB1_OFF:CB1_OFF + CLS_HID], 0.0)        # (B, 384)
    z = jnp.concatenate([cls_h, emb], axis=1)                 # (B, 640)
    scores = (jnp.dot(z.astype(bf16), w2f_ref[...], preferred_element_type=f32)
              + bias_ref[:, B2_OFF:B2_OFF + SCORE_SLAB])      # (B, 128)

    out_ref[...] = jnp.concatenate([emb, scores], axis=1)     # (B, 384)


_VMEM = pl.BlockSpec(memory_space=pltpu.MemorySpace.VMEM)
_N_IN = 7


def _build_call(with_attn):
    out_shape = [jax.ShapeDtypeStruct((B, OUT_SLAB), jnp.float32)]
    if with_attn:
        out_shape.append(jax.ShapeDtypeStruct((BL, ATTN_SLAB), jnp.float32))
    return pl.pallas_call(
        functools.partial(_fused_forward_kernel, with_attn=with_attn),
        out_shape=tuple(out_shape),
        in_specs=[_VMEM] * _N_IN,
        out_specs=tuple([_VMEM] * len(out_shape)),
    )


_FUSED_CALL = {True: _build_call(True), False: _build_call(False)}


# ---------------------------------------------------------------------------
# Parameters: base (math-friendly) layout + one-time packing into kernel layout
# ---------------------------------------------------------------------------
def init_base_params(key):
    """Synthetic parameters in (in, out) layout.
    NOTE: real PyTorch checkpoints store Linear weights as (out, in) and MHA
    uses a fused in_proj; they must be transposed / split before pack_params.
    """
    def nrm(k, shape, scale=0.05):
        return (scale * jax.random.normal(k, shape)).astype(jnp.float32)

    shapes = {
        'wq': (H, H), 'bq': (H,), 'wk': (H, H), 'bk': (H,),
        'wv': (H, H), 'bv': (H,), 'wo': (H, H), 'bo': (H,),
        'proj_w1': (H, PROJ_HID), 'proj_b1': (PROJ_HID,),
        'proj_w2': (PROJ_HID, PROJ_DIM), 'proj_b2': (PROJ_DIM,),
        'pol_w1': (PROJ_DIM, 128), 'pol_b1': (128,),
        'pol_w2': (128, NUM_POL), 'pol_b2': (NUM_POL,),
        'soc_w1': (PROJ_DIM, 64), 'soc_b1': (64,), 'soc_w2': (64, 3), 'soc_b2': (3,),
        'eco_w1': (PROJ_DIM, 64), 'eco_b1': (64,), 'eco_w2': (64, 3), 'eco_b2': (3,),
        'for_w1': (PROJ_DIM, 64), 'for_b1': (64,), 'for_w2': (64, 3), 'for_b2': (3,),
        'ideology_axes': (3, PROJ_DIM),
    }
    keys = jax.random.split(key, len(shapes))
    return {name: nrm(k, shp) for (name, shp), k in zip(shapes.items(), keys)}


def pack_params(p):
    """One-time repack: fused/lane-aligned bf16 weight slabs + one f32 bias slab."""
    f32, bf16 = jnp.float32, jnp.bfloat16

    # 64-row weight slab: proj_w1 | fused wq/wk/wv (128-aligned each) | wo
    w_h64 = jnp.zeros((H, W64_W), f32)
    w_h64 = w_h64.at[:, PW1_COL:PW1_COL + PROJ_HID].set(p['proj_w1'])
    w_h64 = w_h64.at[:, QKV_COL + 0:QKV_COL + H].set(p['wq'])
    w_h64 = w_h64.at[:, QKV_COL + 128:QKV_COL + 128 + H].set(p['wk'])
    w_h64 = w_h64.at[:, QKV_COL + 256:QKV_COL + 256 + H].set(p['wv'])
    w_h64 = w_h64.at[:, WO_COL:WO_COL + H].set(p['wo'])

    # classifier first layers fused (320 -> 384-padded) into one matmul
    cls_w1 = jnp.zeros((PROJ_DIM, CLS_HID), f32)
    cls_w1 = cls_w1.at[:, 0:128].set(p['pol_w1'])
    cls_w1 = cls_w1.at[:, 128:192].set(p['soc_w1'])
    cls_w1 = cls_w1.at[:, 192:256].set(p['eco_w1'])
    cls_w1 = cls_w1.at[:, 256:320].set(p['for_w1'])
    cls_b1 = jnp.zeros((CLS_HID,), f32)
    cls_b1 = cls_b1.at[0:128].set(p['pol_b1'])
    cls_b1 = cls_b1.at[128:192].set(p['soc_b1'])
    cls_b1 = cls_b1.at[192:256].set(p['eco_b1'])
    cls_b1 = cls_b1.at[256:320].set(p['for_b1'])

    # fused (block-diag classifier layer-2 | ideology axes) -> one (640,128) matmul
    w2f = jnp.zeros((FUSE_K, SCORE_SLAB), f32)
    w2f = w2f.at[0:128, POL_OFF:POL_OFF + NUM_POL].set(p['pol_w2'])
    w2f = w2f.at[128:192, SOC_OFF:SOC_OFF + 3].set(p['soc_w2'])
    w2f = w2f.at[192:256, ECO_OFF:ECO_OFF + 3].set(p['eco_w2'])
    w2f = w2f.at[256:320, FOR_OFF:FOR_OFF + 3].set(p['for_w2'])
    w2f = w2f.at[CLS_HID:CLS_HID + PROJ_DIM,
                 AXES_OFF:AXES_OFF + 3].set(p['ideology_axes'].T)

    b2 = jnp.zeros((SCORE_SLAB,), f32)
    b2 = b2.at[POL_OFF:POL_OFF + NUM_POL].set(p['pol_b2'])
    b2 = b2.at[SOC_OFF:SOC_OFF + 3].set(p['soc_b2'])
    b2 = b2.at[ECO_OFF:ECO_OFF + 3].set(p['eco_b2'])
    b2 = b2.at[FOR_OFF:FOR_OFF + 3].set(p['for_b2'])

    # all biases in one lane-aligned f32 slab
    bias_slab = jnp.zeros((1, SLAB_W), f32)
    bias_slab = bias_slab.at[0, BQKV_OFF + 0:BQKV_OFF + H].set(p['bq'])
    bias_slab = bias_slab.at[0, BQKV_OFF + 128:BQKV_OFF + 128 + H].set(p['bk'])
    bias_slab = bias_slab.at[0, BQKV_OFF + 256:BQKV_OFF + 256 + H].set(p['bv'])
    bias_slab = bias_slab.at[0, BO_OFF:BO_OFF + H].set(p['bo'])
    bias_slab = bias_slab.at[0, PB1_OFF:PB1_OFF + PROJ_HID].set(p['proj_b1'])
    bias_slab = bias_slab.at[0, PB2_OFF:PB2_OFF + PROJ_DIM].set(p['proj_b2'])
    bias_slab = bias_slab.at[0, CB1_OFF:CB1_OFF + CLS_HID].set(cls_b1)
    bias_slab = bias_slab.at[0, B2_OFF:B2_OFF + SCORE_SLAB].set(b2)

    return {'w_h64': w_h64.astype(bf16),
            'proj_w2': p['proj_w2'].astype(bf16),
            'cls_w1': cls_w1.astype(bf16),
            'w2_fused': w2f.astype(bf16),
            'bias_slab': bias_slab}


# ---------------------------------------------------------------------------
# Forward wrapper (jitted; slices lane-dense slabs back to module outputs)
# ---------------------------------------------------------------------------
@functools.partial(jax.jit, static_argnames=("return_attention",))
def ideology_forward(hidden_states, attention_mask, kparams, return_attention=True):
    x2 = hidden_states.astype(jnp.float32).reshape(BL, H)
    mask_row = attention_mask.astype(jnp.float32).reshape(1, BL)

    args = (x2, mask_row, kparams['w_h64'], kparams['proj_w2'],
            kparams['cls_w1'], kparams['w2_fused'], kparams['bias_slab'])

    if return_attention:
        out, attn_slab = _FUSED_CALL[True](*args)
    else:
        (out,) = _FUSED_CALL[False](*args)

    emb = out[:, 0:PROJ_DIM]
    scores = out[:, PROJ_DIM:PROJ_DIM + SCORE_SLAB]
    results = {
        'embeddings': emb,
        'political_logits': scores[:, POL_OFF:POL_OFF + NUM_POL],
        'social_logits': scores[:, SOC_OFF:SOC_OFF + 3],
        'economic_logits': scores[:, ECO_OFF:ECO_OFF + 3],
        'foreign_logits': scores[:, FOR_OFF:FOR_OFF + 3],
        'ideology_axes_scores': scores[:, AXES_OFF:AXES_OFF + 3],
    }
    if return_attention:
        a = attn_slab[:, :BL].reshape(B, L, B, L)
        results['attention_weights'] = a[jnp.arange(B), :, jnp.arange(B), :]
    return results


# ---------------------------------------------------------------------------
# Pure-JAX reference (for in-script verification)
# ---------------------------------------------------------------------------
def reference_forward(hidden_states, attention_mask, p):
    x = hidden_states.astype(jnp.float32)
    q = x @ p['wq'] + p['bq']
    k = x @ p['wk'] + p['bk']
    v = x @ p['wv'] + p['bv']

    def heads(t):
        return t.reshape(B, L, NUM_HEADS, HEAD_DIM).transpose(0, 2, 1, 3)

    qh, kh, vh = heads(q), heads(k), heads(v)
    s = jnp.einsum('bnqd,bnkd->bnqk', qh, kh) * SCALE
    pw = jax.nn.softmax(s, axis=-1)
    ctx = jnp.einsum('bnqk,bnkd->bnqd', pw, vh)
    ctx = ctx.transpose(0, 2, 1, 3).reshape(B, L, H)
    attended = ctx @ p['wo'] + p['bo']
    attn_weights = pw.mean(axis=1)

    mask = attention_mask.astype(jnp.float32)[..., None]
    pooled = (attended * mask).sum(axis=1) / mask.sum(axis=1)

    h1 = jax.nn.relu(pooled @ p['proj_w1'] + p['proj_b1'])
    emb = jnp.tanh(h1 @ p['proj_w2'] + p['proj_b2'])
    pol = jax.nn.relu(emb @ p['pol_w1'] + p['pol_b1']) @ p['pol_w2'] + p['pol_b2']
    soc = jax.nn.relu(emb @ p['soc_w1'] + p['soc_b1']) @ p['soc_w2'] + p['soc_b2']
    eco = jax.nn.relu(emb @ p['eco_w1'] + p['eco_b1']) @ p['eco_w2'] + p['eco_b2']
    forn = jax.nn.relu(emb @ p['for_w1'] + p['for_b1']) @ p['for_w2'] + p['for_b2']
    axes = emb @ p['ideology_axes'].T
    return {'embeddings': emb, 'political_logits': pol, 'social_logits': soc,
            'economic_logits': eco, 'foreign_logits': forn,
            'ideology_axes_scores': axes, 'attention_weights': attn_weights}


if __name__ == "__main__":
    key = jax.random.PRNGKey(0)
    k_param, k_x = jax.random.split(key)
    base_params = init_base_params(k_param)
    kparams = pack_params(base_params)

    # synthetic encoder output + attention mask (lengths 8 and 5)
    hidden_states = jax.random.normal(k_x, (B, L, H), dtype=jnp.float32)
    lengths = jnp.array([8, 5], dtype=jnp.int32)
    attention_mask = (jnp.arange(L)[None, :] < lengths[:, None]).astype(jnp.float32)

    out = ideology_forward(hidden_states, attention_mask, kparams, return_attention=True)
    out = jax.block_until_ready(out)

    assert out['embeddings'].shape == (B, PROJ_DIM)
    assert out['political_logits'].shape == (B, NUM_POL)
    assert out['social_logits'].shape == (B, 3)
    assert out['economic_logits'].shape == (B, 3)
    assert out['foreign_logits'].shape == (B, 3)
    assert out['ideology_axes_scores'].shape == (B, 3)
    assert out['attention_weights'].shape == (B, L, L)

    # numeric check vs pure-JAX f32 reference (bf16 weights + approx softmax
    # reciprocal in the kernel -> loose tolerance)
    ref = reference_forward(hidden_states, attention_mask, base_params)
    for name in ('embeddings', 'political_logits', 'social_logits',
                 'economic_logits', 'foreign_logits', 'ideology_axes_scores',
                 'attention_weights'):
        assert jnp.allclose(out[name], ref[name], atol=1e-2, rtol=5e-2), name

    # exercise the no-attention variant too
    out2 = jax.block_until_ready(
        ideology_forward(hidden_states, attention_mask, kparams, return_attention=False))
    assert 'attention_weights' not in out2
    assert out2['embeddings'].shape == (B, PROJ_DIM)

    print("KERNEL_OK")
</pallas_src>

<mosaic_0001>
module attributes {stable_mosaic.version = 11 : i64} {
  func.func @_fused_forward_kernel(%arg0: memref<16x64xf32, #tpu.memory_space<vmem>>, %arg1: memref<1x16xf32, #tpu.memory_space<vmem>>, %arg2: memref<64x960xbf16, #tpu.memory_space<vmem>>, %arg3: memref<512x256xbf16, #tpu.memory_space<vmem>>, %arg4: memref<256x384xbf16, #tpu.memory_space<vmem>>, %arg5: memref<640x128xbf16, #tpu.memory_space<vmem>>, %arg6: memref<1x1792xf32, #tpu.memory_space<vmem>>, %arg7: memref<2x384xf32, #tpu.memory_space<vmem>>, %arg8: memref<16x128xf32, #tpu.memory_space<vmem>>) attributes {dimension_semantics = [], scalar_prefetch = 0 : i64, scratch_operands = 0 : i64, tpu.core_type = #tpu.core_type<tc>} {
    %c0 = arith.constant 0 : index
    %c0_0 = arith.constant 0 : index
    %0 = vector.load %arg0[%c0, %c0_0] : memref<16x64xf32, #tpu.memory_space<vmem>>, vector<16x64xf32>
    %1 = arith.truncf %0 : vector<16x64xf32> to vector<16x64xbf16>
    %c0_1 = arith.constant 0 : index
    %c512 = arith.constant 512 : index
    %2 = vector.load %arg2[%c0_1, %c512] : memref<64x960xbf16, #tpu.memory_space<vmem>>, vector<64x384xbf16>
    %cst = arith.constant dense<0.000000e+00> : vector<16x384xf32>
    %3 = tpu.matmul %1, %2, %cst {dimension_numbers = #tpu.dot_dimension_numbers<[1], [0], [0], [1], [0, 0, 1, 1], [], []>} : vector<16x64xbf16>, vector<64x384xbf16>, vector<16x384xf32> -> vector<16x384xf32>
    %c0_2 = arith.constant 0 : index
    %c0_3 = arith.constant 0 : index
    %4 = vector.load %arg6[%c0_2, %c0_3] : memref<1x1792xf32, #tpu.memory_space<vmem>>, vector<1x384xf32>
    %5 = vector.broadcast %4 : vector<1x384xf32> to vector<16x384xf32>
    %6 = arith.addf %3, %5 : vector<16x384xf32>
    %7 = vector.extract_strided_slice %6 {offsets = [0, 0], sizes = [16, 64], strides = [1, 1]} : vector<16x384xf32> to vector<16x64xf32>
    %8 = vector.extract_strided_slice %6 {offsets = [0, 128], sizes = [16, 64], strides = [1, 1]} : vector<16x384xf32> to vector<16x64xf32>
    %9 = vector.extract_strided_slice %6 {offsets = [0, 256], sizes = [16, 64], strides = [1, 1]} : vector<16x384xf32> to vector<16x64xf32>
    %10 = tpu.transpose %8, [1, 0] : vector<16x64xf32> -> vector<64x16xf32>
    %11 = tpu.concatenate %10, %10, %10, %10, %10, %10, %10, %10 in 1 : vector<64x16xf32>, vector<64x16xf32>, vector<64x16xf32>, vector<64x16xf32>, vector<64x16xf32>, vector<64x16xf32>, vector<64x16xf32>, vector<64x16xf32> -> vector<64x128xf32>
    %12 = tpu.iota {dimensions = array<i32: 0>} : vector<64x128xi32>
    %13 = tpu.iota {dimensions = array<i32: 1>} : vector<64x128xi32>
    %c4_i32 = arith.constant 4 : i32
    %14 = vector.broadcast %c4_i32 : i32 to vector<64x128xi32>
    %15 = arith.shrsi %13, %14 : vector<64x128xi32>
    %c3_i32 = arith.constant 3 : i32
    %16 = vector.broadcast %c3_i32 : i32 to vector<64x128xi32>
    %17 = arith.shrsi %12, %16 : vector<64x128xi32>
    %18 = arith.cmpi eq, %15, %17 : vector<64x128xi32>
    %cst_4 = arith.constant 0.000000e+00 : f32
    %19 = vector.broadcast %cst_4 : f32 to vector<64x128xf32>
    %20 = arith.select %18, %11, %19 : vector<64x128xi1>, vector<64x128xf32>
    %21 = tpu.iota {dimensions = array<i32: 0>} : vector<16x128xi32>
    %22 = tpu.iota {dimensions = array<i32: 1>} : vector<16x128xi32>
    %c15_i32 = arith.constant 15 : i32
    %23 = vector.broadcast %c15_i32 : i32 to vector<16x128xi32>
    %24 = arith.andi %22, %23 : vector<16x128xi32>
    %c3_i32_5 = arith.constant 3 : i32
    %25 = vector.broadcast %c3_i32_5 : i32 to vector<16x128xi32>
    %26 = arith.shrsi %21, %25 : vector<16x128xi32>
    %c3_i32_6 = arith.constant 3 : i32
    %27 = vector.broadcast %c3_i32_6 : i32 to vector<16x128xi32>
    %28 = arith.shrsi %24, %27 : vector<16x128xi32>
    %29 = arith.cmpi eq, %26, %28 : vector<16x128xi32>
    %cst_7 = arith.constant 0.000000e+00 : f32
    %cst_8 = arith.constant -1.000000e+30 : f32
    %30 = vector.broadcast %cst_7 : f32 to vector<16x128xf32>
    %31 = vector.broadcast %cst_8 : f32 to vector<16x128xf32>
    %32 = arith.select %29, %30, %31 : vector<16x128xi1>, vector<16x128xf32>
    %cst_9 = arith.constant dense<0.000000e+00> : vector<16x128xf32>
    %33 = tpu.matmul %7, %20, %cst_9 {dimension_numbers = #tpu.dot_dimension_numbers<[1], [0], [0], [1], [0, 0, 1, 1], [], []>} : vector<16x64xf32>, vector<64x128xf32>, vector<16x128xf32> -> vector<16x128xf32>
    %cst_10 = arith.constant 0.353553385 : f32
    %34 = vector.broadcast %cst_10 : f32 to vector<16x128xf32>
    %35 = arith.mulf %33, %34 : vector<16x128xf32>
    %36 = arith.addf %35, %32 : vector<16x128xf32>
    %cst_11 = arith.constant dense<0xFF800000> : vector<16xf32>
    %37 = vector.multi_reduction <maximumf>, %36, %cst_11 [1] : vector<16x128xf32> to vector<16xf32>
    %38 = vector.shape_cast %37 : vector<16xf32> to vector<16x1xf32>
    %39 = vector.broadcast %38 : vector<16x1xf32> to vector<16x128xf32>
    %40 = arith.subf %36, %39 : vector<16x128xf32>
    %41 = math.exp %40 : vector<16x128xf32>
    %42 = tpu.iota {dimensions = array<i32: 0>} : vector<128x128xi32>
    %c4_i32_12 = arith.constant 4 : i32
    %43 = vector.broadcast %c4_i32_12 : i32 to vector<128x128xi32>
    %44 = arith.shrsi %42, %43 : vector<128x128xi32>
    %45 = tpu.iota {dimensions = array<i32: 1>} : vector<128x128xi32>
    %c4_i32_13 = arith.constant 4 : i32
    %46 = vector.broadcast %c4_i32_13 : i32 to vector<128x128xi32>
    %47 = arith.shrsi %45, %46 : vector<128x128xi32>
    %48 = arith.cmpi eq, %44, %47 : vector<128x128xi32>
    %cst_14 = arith.constant 1.000000e+00 : f32
    %cst_15 = arith.constant 0.000000e+00 : f32
    %49 = vector.broadcast %cst_14 : f32 to vector<128x128xf32>
    %50 = vector.broadcast %cst_15 : f32 to vector<128x128xf32>
    %51 = arith.select %48, %49, %50 : vector<128x128xi1>, vector<128x128xf32>
    %cst_16 = arith.constant dense<0.000000e+00> : vector<16x128xf32>
    %52 = tpu.matmul %41, %51, %cst_16 {dimension_numbers = #tpu.dot_dimension_numbers<[1], [0], [0], [1], [0, 0, 1, 1], [], []>} : vector<16x128xf32>, vector<128x128xf32>, vector<16x128xf32> -> vector<16x128xf32>
    %53 = tpu.reciprocal %52 {approx = true} : vector<16x128xf32> -> vector<16x128xf32>
    %54 = arith.mulf %41, %53 : vector<16x128xf32>
    %55 = tpu.concatenate %9, %9, %9, %9, %9, %9, %9, %9 in 0 : vector<16x64xf32>, vector<16x64xf32>, vector<16x64xf32>, vector<16x64xf32>, vector<16x64xf32>, vector<16x64xf32>, vector<16x64xf32>, vector<16x64xf32> -> vector<128x64xf32>
    %56 = tpu.iota {dimensions = array<i32: 0>} : vector<128x64xi32>
    %57 = tpu.iota {dimensions = array<i32: 1>} : vector<128x64xi32>
    %c4_i32_17 = arith.constant 4 : i32
    %58 = vector.broadcast %c4_i32_17 : i32 to vector<128x64xi32>
    %59 = arith.shrsi %56, %58 : vector<128x64xi32>
    %c3_i32_18 = arith.constant 3 : i32
    %60 = vector.broadcast %c3_i32_18 : i32 to vector<128x64xi32>
    %61 = arith.shrsi %57, %60 : vector<128x64xi32>
    %62 = arith.cmpi eq, %59, %61 : vector<128x64xi32>
    %cst_19 = arith.constant 0.000000e+00 : f32
    %63 = vector.broadcast %cst_19 : f32 to vector<128x64xf32>
    %64 = arith.select %62, %55, %63 : vector<128x64xi1>, vector<128x64xf32>
    %cst_20 = arith.constant dense<0.000000e+00> : vector<16x64xf32>
    %65 = tpu.matmul %54, %64, %cst_20 {dimension_numbers = #tpu.dot_dimension_numbers<[1], [0], [0], [1], [0, 0, 1, 1], [], []>} : vector<16x128xf32>, vector<128x64xf32>, vector<16x64xf32> -> vector<16x64xf32>
    %66 = arith.truncf %65 : vector<16x64xf32> to vector<16x64xbf16>
    %c0_21 = arith.constant 0 : index
    %c896 = arith.constant 896 : index
    %67 = vector.load %arg2[%c0_21, %c896] : memref<64x960xbf16, #tpu.memory_space<vmem>>, vector<64x64xbf16>
    %cst_22 = arith.constant dense<0.000000e+00> : vector<16x64xf32>
    %68 = tpu.matmul %66, %67, %cst_22 {dimension_numbers = #tpu.dot_dimension_numbers<[1], [0], [0], [1], [0, 0, 1, 1], [], []>} : vector<16x64xbf16>, vector<64x64xbf16>, vector<16x64xf32> -> vector<16x64xf32>
    %c0_23 = arith.constant 0 : index
    %c384 = arith.constant 384 : index
    %69 = vector.load %arg6[%c0_23, %c384] : memref<1x1792xf32, #tpu.memory_space<vmem>>, vector<1x64xf32>
    %70 = vector.broadcast %69 : vector<1x64xf32> to vector<16x64xf32>
    %71 = arith.addf %68, %70 : vector<16x64xf32>
    %72 = tpu.iota {dimensions = array<i32: 0>} : vector<16x16xi32>
    %73 = tpu.iota {dimensions = array<i32: 1>} : vector<16x16xi32>
    %74 = arith.cmpi eq, %72, %73 : vector<16x16xi32>
    %cst_24 = arith.constant 1.250000e-01 : f32
    %cst_25 = arith.constant 0.000000e+00 : f32
    %75 = vector.broadcast %cst_24 : f32 to vector<16x16xf32>
    %76 = vector.broadcast %cst_25 : f32 to vector<16x16xf32>
    %77 = arith.select %74, %75, %76 : vector<16x16xi1>, vector<16x16xf32>
    %78 = tpu.concatenate %77, %77, %77, %77, %77, %77, %77, %77 in 0 : vector<16x16xf32>, vector<16x16xf32>, vector<16x16xf32>, vector<16x16xf32>, vector<16x16xf32>, vector<16x16xf32>, vector<16x16xf32>, vector<16x16xf32> -> vector<128x16xf32>
    %cst_26 = arith.constant dense<0.000000e+00> : vector<16x16xf32>
    %79 = tpu.matmul %54, %78, %cst_26 {dimension_numbers = #tpu.dot_dimension_numbers<[1], [0], [0], [1], [0, 0, 1, 1], [], []>} : vector<16x128xf32>, vector<128x16xf32>, vector<16x16xf32> -> vector<16x16xf32>
    %cst_27 = arith.constant 0.000000e+00 : f32
    %80 = vector.broadcast %cst_27 : f32 to vector<16x112xf32>
    %81 = tpu.concatenate %79, %80 in 1 : vector<16x16xf32>, vector<16x112xf32> -> vector<16x128xf32>
    %c0_28 = arith.constant 0 : index
    %c0_29 = arith.constant 0 : index
    %82 = vector.load %arg8[%c0_28, %c0_29] : memref<16x128xf32, #tpu.memory_space<vmem>>, vector<16x128xf32>
    tpu.vector_store %arg8[%c0_28, %c0_29], %81 {strides = array<i32>} : memref<16x128xf32, #tpu.memory_space<vmem>>, vector<16x128xf32>,
    %c0_30 = arith.constant 0 : index
    %c0_31 = arith.constant 0 : index
    %83 = vector.load %arg1[%c0_30, %c0_31] : memref<1x16xf32, #tpu.memory_space<vmem>>, vector<1x16xf32>
    %84 = vector.shape_cast %83 : vector<1x16xf32> to vector<1x16xf32>
    %85 = vector.broadcast %84 : vector<1x16xf32> to vector<2x16xf32>
    %86 = tpu.iota {dimensions = array<i32: 0>} : vector<2x16xi32>
    %87 = tpu.iota {dimensions = array<i32: 1>} : vector<2x16xi32>
    %c3_i32_32 = arith.constant 3 : i32
    %88 = vector.broadcast %c3_i32_32 : i32 to vector<2x16xi32>
    %89 = arith.shrsi %87, %88 : vector<2x16xi32>
    %90 = arith.cmpi eq, %86, %89 : vector<2x16xi32>
    %cst_33 = arith.constant 0.000000e+00 : f32
    %91 = vector.broadcast %cst_33 : f32 to vector<2x16xf32>
    %92 = arith.select %90, %85, %91 : vector<2x16xi1>, vector<2x16xf32>
    %cst_34 = arith.constant dense<0.000000e+00> : vector<2x64xf32>
    %93 = tpu.matmul %92, %71, %cst_34 {dimension_numbers = #tpu.dot_dimension_numbers<[1], [0], [0], [1], [0, 0, 1, 1], [], []>} : vector<2x16xf32>, vector<16x64xf32>, vector<2x64xf32> -> vector<2x64xf32>
    %cst_35 = arith.constant dense<0.000000e+00> : vector<2xf32>
    %94 = vector.multi_reduction <add>, %92, %cst_35 [1] : vector<2x16xf32> to vector<2xf32>
    %95 = vector.shape_cast %94 : vector<2xf32> to vector<2x1xf32>
    %96 = vector.broadcast %95 : vector<2x1xf32> to vector<2x64xf32>
    %97 = arith.divf %93, %96 : vector<2x64xf32>
    %98 = arith.truncf %97 : vector<2x64xf32> to vector<2x64xbf16>
    %c0_36 = arith.constant 0 : index
    %c0_37 = arith.constant 0 : index
    %99 = vector.load %arg2[%c0_36, %c0_37] : memref<64x960xbf16, #tpu.memory_space<vmem>>, vector<64x512xbf16>
    %cst_38 = arith.constant dense<0.000000e+00> : vector<2x512xf32>
    %100 = tpu.matmul %98, %99, %cst_38 {dimension_numbers = #tpu.dot_dimension_numbers<[1], [0], [0], [1], [0, 0, 1, 1], [], []>} : vector<2x64xbf16>, vector<64x512xbf16>, vector<2x512xf32> -> vector<2x512xf32>
    %c0_39 = arith.constant 0 : index
    %c512_40 = arith.constant 512 : index
    %101 = vector.load %arg6[%c0_39, %c512_40] : memref<1x1792xf32, #tpu.memory_space<vmem>>, vector<1x512xf32>
    %102 = vector.broadcast %101 : vector<1x512xf32> to vector<2x512xf32>
    %103 = arith.addf %100, %102 : vector<2x512xf32>
    %cst_41 = arith.constant 0.000000e+00 : f32
    %104 = vector.broadcast %cst_41 : f32 to vector<2x512xf32>
    %105 = arith.maximumf %103, %104 : vector<2x512xf32>
    %106 = arith.truncf %105 : vector<2x512xf32> to vector<2x512xbf16>
    %c0_42 = arith.constant 0 : index
    %c0_43 = arith.constant 0 : index
    %107 = vector.load %arg3[%c0_42, %c0_43] : memref<512x256xbf16, #tpu.memory_space<vmem>>, vector<512x256xbf16>
    %cst_44 = arith.constant dense<0.000000e+00> : vector<2x256xf32>
    %108 = tpu.matmul %106, %107, %cst_44 {dimension_numbers = #tpu.dot_dimension_numbers<[1], [0], [0], [1], [0, 0, 1, 1], [], []>} : vector<2x512xbf16>, vector<512x256xbf16>, vector<2x256xf32> -> vector<2x256xf32>
    %c0_45 = arith.constant 0 : index
    %c1024 = arith.constant 1024 : index
    %109 = vector.load %arg6[%c0_45, %c1024] : memref<1x1792xf32, #tpu.memory_space<vmem>>, vector<1x256xf32>
    %110 = vector.broadcast %109 : vector<1x256xf32> to vector<2x256xf32>
    %111 = arith.addf %108, %110 : vector<2x256xf32>
    %112 = math.tanh %111 : vector<2x256xf32>
    %113 = arith.truncf %112 : vector<2x256xf32> to vector<2x256xbf16>
    %c0_46 = arith.constant 0 : index
    %c0_47 = arith.constant 0 : index
    %114 = vector.load %arg4[%c0_46, %c0_47] : memref<256x384xbf16, #tpu.memory_space<vmem>>, vector<256x384xbf16>
    %cst_48 = arith.constant dense<0.000000e+00> : vector<2x384xf32>
    %115 = tpu.matmul %113, %114, %cst_48 {dimension_numbers = #tpu.dot_dimension_numbers<[1], [0], [0], [1], [0, 0, 1, 1], [], []>} : vector<2x256xbf16>, vector<256x384xbf16>, vector<2x384xf32> -> vector<2x384xf32>
    %c0_49 = arith.constant 0 : index
    %c1280 = arith.constant 1280 : index
    %116 = vector.load %arg6[%c0_49, %c1280] : memref<1x1792xf32, #tpu.memory_space<vmem>>, vector<1x384xf32>
    %117 = vector.broadcast %116 : vector<1x384xf32> to vector<2x384xf32>
    %118 = arith.addf %115, %117 : vector<2x384xf32>
    %cst_50 = arith.constant 0.000000e+00 : f32
    %119 = vector.broadcast %cst_50 : f32 to vector<2x384xf32>
    %120 = arith.maximumf %118, %119 : vector<2x384xf32>
    %121 = tpu.concatenate %120, %112 in 1 : vector<2x384xf32>, vector<2x256xf32> -> vector<2x640xf32>
    %122 = arith.truncf %121 : vector<2x640xf32> to vector<2x640xbf16>
    %c0_51 = arith.constant 0 : index
    %c0_52 = arith.constant 0 : index
    %123 = vector.load %arg5[%c0_51, %c0_52] : memref<640x128xbf16, #tpu.memory_space<vmem>>, vector<640x128xbf16>
    %cst_53 = arith.constant dense<0.000000e+00> : vector<2x128xf32>
    %124 = tpu.matmul %122, %123, %cst_53 {dimension_numbers = #tpu.dot_dimension_numbers<[1], [0], [0], [1], [0, 0, 1, 1], [], []>} : vector<2x640xbf16>, vector<640x128xbf16>, vector<2x128xf32> -> vector<2x128xf32>
    %c0_54 = arith.constant 0 : index
    %c1664 = arith.constant 1664 : index
    %125 = vector.load %arg6[%c0_54, %c1664] : memref<1x1792xf32, #tpu.memory_space<vmem>>, vector<1x128xf32>
    %126 = vector.broadcast %125 : vector<1x128xf32> to vector<2x128xf32>
    %127 = arith.addf %124, %126 : vector<2x128xf32>
    %128 = tpu.concatenate %112, %127 in 1 : vector<2x256xf32>, vector<2x128xf32> -> vector<2x384xf32>
    %c0_55 = arith.constant 0 : index
    %c0_56 = arith.constant 0 : index
    %129 = vector.load %arg7[%c0_55, %c0_56] : memref<2x384xf32, #tpu.memory_space<vmem>>, vector<2x384xf32>
    tpu.vector_store %arg7[%c0_55, %c0_56], %128 {strides = array<i32>} : memref<2x384xf32, #tpu.memory_space<vmem>>, vector<2x384xf32>,
    return
  }
}

</mosaic_0001>

<llo_original>
// kernel: ideology_forward.1
$region0: #{ideology_forward.1}
  #allocation0 [shape = 'u32[]', space=smem, size = 0x4, offset = 0x4, fixed_abs, tag = 'smem constant byte address 0x4 - core index']
  #allocation1 [shape = 'u32[72,128]{1,0:T(1,128)}', space=vmem, size = 0x9000, scoped, tag = 'internal scratch']
  %s0 = inlined_call_operand.hbm [shape: f32[16,64], index: 0, kind: input, shape index: {}]
  %s1 = inlined_call_operand.vmem [shape: f32[1,16], index: 1, kind: input, shape index: {}]
  %s2 = inlined_call_operand.hbm [shape: bf16[64,960], index: 2, kind: input, shape index: {}]
  %s3 = inlined_call_operand.hbm [shape: bf16[512,256], index: 3, kind: input, shape index: {}]
  %s4 = inlined_call_operand.hbm [shape: bf16[256,384], index: 4, kind: input, shape index: {}]
  %s5 = inlined_call_operand.hbm [shape: bf16[640,128], index: 5, kind: input, shape index: {}]
  %s6 = inlined_call_operand.hbm [shape: f32[1,1792], index: 6, kind: input, shape index: {}]
  %s7 = inlined_call_operand.vmem [shape: f32[2,384], index: 7, kind: output, shape index: {0}]
  %s8 = inlined_call_operand.vmem [shape: f32[16,128], index: 8, kind: output, shape index: {1}]
  %9 = xla_tuple %s7, %s8
  %s10 = sld [smem:[#allocation0]]
  $region70: #{ideology_forward.1} parent=0
    _
  %s12 = ssub.s32 1, %s10
  %s13 = scalar_select 0, %s12, %s10
  $region1: #{ideology_forward.1} parent=0
    #allocation2 [shape = 'u8[8192]{0}', space=vmem, size = 0x2000, scoped, tag = 'input window, operand 0, single buffered']
    #allocation3 [shape = 's32[1]{0}', space=sflag, size = 0x4, scoped, tag = 'scoped memory for ideology_forward.1']
    #allocation4 [shape = 'u8[131072]{0}', space=vmem, size = 0x20000, scoped, tag = 'input window, operand 2, single buffered']
    #allocation5 [shape = 's32[1]{0}', space=sflag, size = 0x4, scoped, tag = 'scoped memory for ideology_forward.1']
    #allocation6 [shape = 'u8[262144]{0}', space=vmem, size = 0x40000, scoped, tag = 'input window, operand 3, single buffered']
    #allocation7 [shape = 'u8[196608]{0}', space=vmem, size = 0x30000, scoped, tag = 'input window, operand 4, single buffered']
    #allocation8 [shape = 's32[1]{0}', space=sflag, size = 0x4, scoped, tag = 'scoped memory for ideology_forward.1']
    #allocation9 [shape = 'u8[163840]{0}', space=vmem, size = 0x28000, scoped, tag = 'input window, operand 5, single buffered']
    #allocation10 [shape = 'u8[7168]{0}', space=vmem, size = 0x1c00, scoped, tag = 'input window, operand 6, single buffered']
    #allocation11 [shape = 's32[1]{0}', space=sflag, size = 0x4, scoped, tag = 'scoped memory for ideology_forward.1']
    %14 = vsyncpa [#allocation3], 0
    %15 = vsyncpa [#allocation5], 0
    %16 = vsyncpa [#allocation8], 0
    %17 = vsyncpa [#allocation11], 0
    // Predicated region
    $region2: #{ideology_forward.1} parent=1 // pred_check
      _
    $region3: #{ideology_forward.1} parent=1 // pred_check_branch
      %19 = sbr.rel (0) target = $region5
    $region4: #{ideology_forward.1} parent=1 // pred_region
      %21 = vsyncadd [#allocation3], 0
      %s22 = sshll.u32 %s0, 4
      %s23 = int_to_ptr.hbm [resolvable:$true] %s22
      %s24 = sshll.u32 [#allocation2], 4
      %s25 = int_to_ptr.vmem [resolvable:$true] %s24
      %30 = dma.hbm_to_vmem [thread:$0]  %s23, 256, %s25, [#allocation3], 128, 128, 8
    $region5: #{ideology_forward.1} parent=1 // pred_fallthru
      _
    // Predicated region
    $region6: #{ideology_forward.1} parent=1 // pred_check
      _
    $region7: #{ideology_forward.1} parent=1 // pred_check_branch
      %32 = sbr.rel (0) target = $region9
    $region8: #{ideology_forward.1} parent=1 // pred_region
      _
    $region9: #{ideology_forward.1} parent=1 // pred_fallthru
      _
    // Predicated region
    $region10: #{ideology_forward.1} parent=1 // pred_check
      _
    $region11: #{ideology_forward.1} parent=1 // pred_check_branch
      %34 = sbr.rel (0) target = $region13
    $region12: #{ideology_forward.1} parent=1 // pred_region
      %36 = vsyncadd [#allocation5], 0
      %s37 = sshll.u32 %s2, 4
      %s38 = int_to_ptr.hbm [resolvable:$true] %s37
      %s39 = sshll.u32 [#allocation4], 4
      %s40 = int_to_ptr.vmem [resolvable:$true] %s39
      %45 = dma.hbm_to_vmem [thread:$0]  %s38, 4096, %s40, [#allocation5], 512, 512, 32
    $region13: #{ideology_forward.1} parent=1 // pred_fallthru
      _
    // Predicated region
    $region14: #{ideology_forward.1} parent=1 // pred_check
      _
    $region15: #{ideology_forward.1} parent=1 // pred_check_branch
      %47 = sbr.rel (0) target = $region17
    $region16: #{ideology_forward.1} parent=1 // pred_region
      %49 = vsyncadd [#allocation5], 0
      %s50 = sshll.u32 %s3, 4
      %s51 = int_to_ptr.hbm [resolvable:$true] %s50
      %s52 = sshll.u32 [#allocation6], 4
      %s53 = int_to_ptr.vmem [resolvable:$true] %s52
      %58 = dma.hbm_to_vmem [thread:$0]  %s51, 8192, %s53, [#allocation5], 128, 128, 8
    $region17: #{ideology_forward.1} parent=1 // pred_fallthru
      _
    // Predicated region
    $region18: #{ideology_forward.1} parent=1 // pred_check
      _
    $region19: #{ideology_forward.1} parent=1 // pred_check_branch
      %60 = sbr.rel (0) target = $region21
    $region20: #{ideology_forward.1} parent=1 // pred_region
      %62 = vsyncadd [#allocation8], 0
      %s63 = sshll.u32 %s4, 4
      %s64 = int_to_ptr.hbm [resolvable:$true] %s63
      %s65 = sshll.u32 [#allocation7], 4
      %s66 = int_to_ptr.vmem [resolvable:$true] %s65
      %71 = dma.hbm_to_vmem [thread:$0]  %s64, 6144, %s66, [#allocation8], 192, 192, 12
    $region21: #{ideology_forward.1} parent=1 // pred_fallthru
      _
    // Predicated region
    $region22: #{ideology_forward.1} parent=1 // pred_check
      _
    $region23: #{ideology_forward.1} parent=1 // pred_check_branch
      %73 = sbr.rel (0) target = $region25
    $region24: #{ideology_forward.1} parent=1 // pred_region
      %75 = vsyncadd [#allocation8], 0
      %s76 = sshll.u32 %s5, 4
      %s77 = int_to_ptr.hbm [resolvable:$true] %s76
      %s78 = sshll.u32 [#allocation9], 4
      %s79 = int_to_ptr.vmem [resolvable:$true] %s78
      %84 = dma.hbm_to_vmem [thread:$0]  %s77, 5120, %s79, [#allocation8], 64, 64, 4
    $region25: #{ideology_forward.1} parent=1 // pred_fallthru
      _
    // Predicated region
    $region26: #{ideology_forward.1} parent=1 // pred_check
      _
    $region27: #{ideology_forward.1} parent=1 // pred_check_branch
      %86 = sbr.rel (0) target = $region29
    $region28: #{ideology_forward.1} parent=1 // pred_region
      %88 = vsyncadd [#allocation11], 0
      %s90 = sshll.u32 %s6, 4
      %s91 = int_to_ptr.hbm [resolvable:$true] %s90
      %s92 = sshll.u32 [#allocation10], 4
      %s93 = int_to_ptr.vmem [resolvable:$true] %s92
      %95 = dma.hbm_to_vmem [thread:$0]  %s91, 224, %s93, [#allocation11]
    $region29: #{ideology_forward.1} parent=1 // pred_fallthru
      _
    // Predicated region
    $region30: #{ideology_forward.1} parent=1 // pred_check
      _
    $region31: #{ideology_forward.1} parent=1 // pred_check_branch
      %97 = sbr.rel (0) target = $region33
    $region32: #{ideology_forward.1} parent=1 // pred_region
      %99 = dma.done [#allocation3], 256
    $region33: #{ideology_forward.1} parent=1 // pred_fallthru
      _
    // Predicated region
    $region34: #{ideology_forward.1} parent=1 // pred_check
      _
    $region35: #{ideology_forward.1} parent=1 // pred_check_branch
      %101 = sbr.rel (0) target = $region37
    $region36: #{ideology_forward.1} parent=1 // pred_region
      %103 = dma.done [#allocation5], 4096
    $region37: #{ideology_forward.1} parent=1 // pred_fallthru
      _
    // Predicated region
    $region38: #{ideology_forward.1} parent=1 // pred_check
      _
    $region39: #{ideology_forward.1} parent=1 // pred_check_branch
      %105 = sbr.rel (0) target = $region41
    $region40: #{ideology_forward.1} parent=1 // pred_region
      %107 = dma.done [#allocation5], 8192
    $region41: #{ideology_forward.1} parent=1 // pred_fallthru
      _
    // Predicated region
    $region42: #{ideology_forward.1} parent=1 // pred_check
      _
    $region43: #{ideology_forward.1} parent=1 // pred_check_branch
      %109 = sbr.rel (0) target = $region45
    $region44: #{ideology_forward.1} parent=1 // pred_region
      %111 = dma.done [#allocation8], 6144
    $region45: #{ideology_forward.1} parent=1 // pred_fallthru
      _
    // Predicated region
    $region46: #{ideology_forward.1} parent=1 // pred_check
      _
    $region47: #{ideology_forward.1} parent=1 // pred_check_branch
      %113 = sbr.rel (0) target = $region49
    $region48: #{ideology_forward.1} parent=1 // pred_region
      %115 = dma.done [#allocation8], 5120
    $region49: #{ideology_forward.1} parent=1 // pred_fallthru
      _
    // Predicated region
    $region50: #{ideology_forward.1} parent=1 // pred_check
      _
    $region51: #{ideology_forward.1} parent=1 // pred_check_branch
      %117 = sbr.rel (0) target = $region53
    $region52: #{ideology_forward.1} parent=1 // pred_region
      %119 = dma.done [#allocation11], 224
    $region53: #{ideology_forward.1} parent=1 // pred_fallthru
      _
    %v121 = vld [vmem:[#allocation2] sm:$0xff]
    %v122 = vld [vmem:[#allocation2 + $0x8] sm:$0xff]
    %v123 = vpack.c.bf16 %v122, %v121
    %v124 = vld [vmem:[#allocation4 + $0x10] sm:$0xff]
    %v125 = vld [vmem:[#allocation4 + $0x18] sm:$0xf]
    %v126 = vld [vmem:[#allocation4 + $0x30] sm:$0xff]
    %v127 = vld [vmem:[#allocation4 + $0x38] sm:$0xf]
    %v128 = vld [vmem:[#allocation4 + $0x50] sm:$0xff]
    %v129 = vld [vmem:[#allocation4 + $0x58] sm:$0xf]
    %v130 = vld [vmem:[#allocation4 + $0x70] sm:$0xff]
    %v131 = vld [vmem:[#allocation4 + $0x78] sm:$0xf]
    %v132 = vld [vmem:[#allocation4 + $0x90] sm:$0xff]
    %v133 = vld [vmem:[#allocation4 + $0x98] sm:$0xf]
    %v134 = vld [vmem:[#allocation4 + $0xb0] sm:$0xff]
    %v135 = vld [vmem:[#allocation4 + $0xb8] sm:$0xf]
    %v136 = vld [vmem:[#allocation4 + $0xd0] sm:$0xff]
    %v137 = vld [vmem:[#allocation4 + $0xd8] sm:$0xf]
    %v138 = vld [vmem:[#allocation4 + $0xf0] sm:$0xff]
    %v139 = vld [vmem:[#allocation4 + $0xf8] sm:$0xf]
    %v140 = vld [vmem:[#allocation10] sm:$0x7]
    %v142 = vperm.slane %v140, 0
    %v143 = vperm.slane %v140, 1
    %v144 = vperm.slane %v140, 2
    %v164 = vunpack.c.l.b16 %v124
    %v165 = vunpack.c.h.b16 %v124
    %v166 = vunpack.c.l.b16 %v125
    %v167 = vunpack.c.l.b16 %v126
    %v168 = vunpack.c.h.b16 %v126
    %v169 = vunpack.c.l.b16 %v127
    %v170 = vunpack.c.l.b16 %v128
    %v171 = vunpack.c.h.b16 %v128
    %v172 = vunpack.c.l.b16 %v129
    %v173 = vunpack.c.l.b16 %v130
    %v174 = vunpack.c.h.b16 %v130
    %v175 = vunpack.c.l.b16 %v131
    %v176 = vunpack.c.l.b16 %v132
    %v177 = vunpack.c.h.b16 %v132
    %v178 = vunpack.c.l.b16 %v133
    %v179 = vunpack.c.l.b16 %v134
    %v180 = vunpack.c.h.b16 %v134
    %v181 = vunpack.c.l.b16 %v135
    %v182 = vunpack.c.l.b16 %v136
    %v183 = vunpack.c.h.b16 %v136
    %v184 = vunpack.c.l.b16 %v137
    %v185 = vunpack.c.l.b16 %v138
    %v186 = vunpack.c.h.b16 %v138
    %v187 = vunpack.c.l.b16 %v139
    %v188 = vpack.c.b16 %v167, %v164
    %v189 = vpack.c.b16 %v168, %v165
    %v190 = vpack.c.b16 %v169, %v166
    %v191 = vpack.c.b16 %v173, %v170
    %v192 = vpack.c.b16 %v174, %v171
    %v193 = vpack.c.b16 %v175, %v172
    %v194 = vpack.c.b16 %v179, %v176
    %v195 = vpack.c.b16 %v180, %v177
    %v196 = vpack.c.b16 %v181, %v178
    %v197 = vpack.c.b16 %v185, %v182
    %v198 = vpack.c.b16 %v186, %v183
    %v199 = vpack.c.b16 %v187, %v184
    %vm212 = vcmask 523264
    %v214 = vsel %vm212, %v123, 0
    %216 = vmatpush.bf16.msra.mxu0 0
    %217 = vmatpush.bf16.msra.mxu0 0
    %218 = vmatpush.bf16.msra.mxu0 0
    %219 = vmatpush.bf16.msra.mxu0 0
    %220 = vmatpush.bf16.msra.mxu0 %v197
    %221 = vmatpush.bf16.msra.mxu0 %v194
    %222 = vmatpush.bf16.msra.mxu0 %v191
    %223 = vmatpush.bf16.msra.mxu0 %v188
    %224 = vmatmul.bf16.gmra.mxu0 %v214
    %v225 = vpop.f32.mrf.mxu0
    %v226 = vadd.f32 %v142, %v225
    %v227 = vpop.f32.mrf.mxu0
    %v228 = vadd.f32 %v142, %v227
    %229 = vdwg.mxu0
    %230 = vmatpush.bf16.msra.mxu0 0
    %231 = vmatpush.bf16.msra.mxu0 0
    %232 = vmatpush.bf16.msra.mxu0 0
    %233 = vmatpush.bf16.msra.mxu0 0
    %234 = vmatpush.bf16.msra.mxu0 %v198
    %235 = vmatpush.bf16.msra.mxu0 %v195
    %236 = vmatpush.bf16.msra.mxu0 %v192
    %237 = vmatpush.bf16.msra.mxu0 %v189
    %238 = vmatmul.bf16.gmra.mxu0 %v214
    %v239 = vpop.f32.mrf.mxu0
    %v240 = vadd.f32 %v143, %v239
    %v241 = vpop.f32.mrf.mxu0
    %v242 = vadd.f32 %v143, %v241
    %243 = vdwg.mxu0
    %244 = vmatpush.bf16.msra.mxu0 0
    %245 = vmatpush.bf16.msra.mxu0 0
    %246 = vmatpush.bf16.msra.mxu0 0
    %247 = vmatpush.bf16.msra.mxu0 0
    %248 = vmatpush.bf16.msra.mxu0 %v199
    %249 = vmatpush.bf16.msra.mxu0 %v196
    %250 = vmatpush.bf16.msra.mxu0 %v193
    %251 = vmatpush.bf16.msra.mxu0 %v190
    %252 = vmatmul.bf16.gmra.mxu0 %v214
    %v253 = vpop.f32.mrf.mxu0
    %v254 = vadd.f32 %v144, %v253
    %v255 = vpop.f32.mrf.mxu0
    %v256 = vadd.f32 %v144, %v255
    %257 = vdwg.mxu0
    %258 = vxpose.xlu0.b32.start [1/16] %v240, 128
    %259 = vxpose.xlu0.b32.cont [2/16] %v242, 128
    %260 = vxpose.xlu0.b32.cont [3/16] 0.0, 128
    %261 = vxpose.xlu0.b32.cont [4/16] 0.0, 128
    %262 = vxpose.xlu0.b32.cont [5/16] 0.0, 128
    %263 = vxpose.xlu0.b32.cont [6/16] 0.0, 128
    %264 = vxpose.xlu0.b32.cont [7/16] 0.0, 128
    %265 = vxpose.xlu0.b32.cont [8/16] 0.0, 128
    %266 = vxpose.xlu0.b32.cont [9/16] 0.0, 128
    %267 = vxpose.xlu0.b32.cont [10/16] 0.0, 128
    %268 = vxpose.xlu0.b32.cont [11/16] 0.0, 128
    %269 = vxpose.xlu0.b32.cont [12/16] 0.0, 128
    %270 = vxpose.xlu0.b32.cont [13/16] 0.0, 128
    %271 = vxpose.xlu0.b32.cont [14/16] 0.0, 128
    %272 = vxpose.xlu0.b32.cont [15/16] 0.0, 128
    %273 = vxpose.xlu0.b32.end [16/16] 0.0, 128
    %v274 = vpop.trf.xlu0
    %v275 = vpop.trf.xlu0
    %v276 = vpop.trf.xlu0
    %v277 = vpop.trf.xlu0
    %v278 = vpop.trf.xlu0
    %v279 = vpop.trf.xlu0
    %v280 = vpop.trf.xlu0
    %v281 = vpop.trf.xlu0
    %v282 = vpop.trf.xlu0
    %v283 = vpop.trf.xlu0
    %v284 = vpop.trf.xlu0
    %v285 = vpop.trf.xlu0
    %v286 = vpop.trf.xlu0
    %v287 = vpop.trf.xlu0
    %v288 = vpop.trf.xlu0
    %v289 = vpop.trf.xlu0
    %298 = vrot.lane.b32.xlu0 %v274, 16
    %v299 = vpop.permute.xlu0 %298
    %300 = vrot.lane.b32.xlu0 %v275, 16
    %v301 = vpop.permute.xlu0 %300
    %302 = vrot.lane.b32.xlu0 %v276, 16
    %v303 = vpop.permute.xlu0 %302
    %304 = vrot.lane.b32.xlu0 %v277, 16
    %v305 = vpop.permute.xlu0 %304
    %306 = vrot.lane.b32.xlu0 %v278, 16
    %v307 = vpop.permute.xlu0 %306
    %308 = vrot.lane.b32.xlu0 %v279, 16
    %v309 = vpop.permute.xlu0 %308
    %310 = vrot.lane.b32.xlu0 %v280, 16
    %v311 = vpop.permute.xlu0 %310
    %312 = vrot.lane.b32.xlu0 %v281, 16
    %v313 = vpop.permute.xlu0 %312
    %322 = vrot.lane.b32.xlu0 %v274, 32
    %v323 = vpop.permute.xlu0 %322
    %324 = vrot.lane.b32.xlu0 %v275, 32
    %v325 = vpop.permute.xlu0 %324
    %326 = vrot.lane.b32.xlu0 %v276, 32
    %v327 = vpop.permute.xlu0 %326
    %328 = vrot.lane.b32.xlu0 %v277, 32
    %v329 = vpop.permute.xlu0 %328
    %330 = vrot.lane.b32.xlu0 %v278, 32
    %v331 = vpop.permute.xlu0 %330
    %332 = vrot.lane.b32.xlu0 %v279, 32
    %v333 = vpop.permute.xlu0 %332
    %334 = vrot.lane.b32.xlu0 %v280, 32
    %v335 = vpop.permute.xlu0 %334
    %336 = vrot.lane.b32.xlu0 %v281, 32
    %v337 = vpop.permute.xlu0 %336
    %346 = vrot.lane.b32.xlu0 %v274, 48
    %v347 = vpop.permute.xlu0 %346
    %348 = vrot.lane.b32.xlu0 %v275, 48
    %v349 = vpop.permute.xlu0 %348
    %350 = vrot.lane.b32.xlu0 %v276, 48
    %v351 = vpop.permute.xlu0 %350
    %352 = vrot.lane.b32.xlu0 %v277, 48
    %v353 = vpop.permute.xlu0 %352
    %354 = vrot.lane.b32.xlu0 %v278, 48
    %v355 = vpop.permute.xlu0 %354
    %356 = vrot.lane.b32.xlu0 %v279, 48
    %v357 = vpop.permute.xlu0 %356
    %358 = vrot.lane.b32.xlu0 %v280, 48
    %v359 = vpop.permute.xlu0 %358
    %360 = vrot.lane.b32.xlu0 %v281, 48
    %v361 = vpop.permute.xlu0 %360
    %370 = vrot.lane.b32.xlu0 %v274, 64
    %v371 = vpop.permute.xlu0 %370
    %372 = vrot.lane.b32.xlu0 %v275, 64
    %v373 = vpop.permute.xlu0 %372
    %374 = vrot.lane.b32.xlu0 %v276, 64
    %v375 = vpop.permute.xlu0 %374
    %376 = vrot.lane.b32.xlu0 %v277, 64
    %v377 = vpop.permute.xlu0 %376
    %378 = vrot.lane.b32.xlu0 %v278, 64
    %v379 = vpop.permute.xlu0 %378
    %380 = vrot.lane.b32.xlu0 %v279, 64
    %v381 = vpop.permute.xlu0 %380
    %382 = vrot.lane.b32.xlu0 %v280, 64
    %v383 = vpop.permute.xlu0 %382
    %384 = vrot.lane.b32.xlu0 %v281, 64
    %v385 = vpop.permute.xlu0 %384
    %394 = vrot.lane.b32.xlu0 %v274, 80
    %v395 = vpop.permute.xlu0 %394
    %396 = vrot.lane.b32.xlu0 %v275, 80
    %v397 = vpop.permute.xlu0 %396
    %398 = vrot.lane.b32.xlu0 %v276, 80
    %v399 = vpop.permute.xlu0 %398
    %400 = vrot.lane.b32.xlu0 %v277, 80
    %v401 = vpop.permute.xlu0 %400
    %402 = vrot.lane.b32.xlu0 %v278, 80
    %v403 = vpop.permute.xlu0 %402
    %404 = vrot.lane.b32.xlu0 %v279, 80
    %v405 = vpop.permute.xlu0 %404
    %406 = vrot.lane.b32.xlu0 %v280, 80
    %v407 = vpop.permute.xlu0 %406
    %408 = vrot.lane.b32.xlu0 %v281, 80
    %v409 = vpop.permute.xlu0 %408
    %418 = vrot.lane.b32.xlu0 %v274, 96
    %v419 = vpop.permute.xlu0 %418
    %420 = vrot.lane.b32.xlu0 %v275, 96
    %v421 = vpop.permute.xlu0 %420
    %422 = vrot.lane.b32.xlu0 %v276, 96
    %v423 = vpop.permute.xlu0 %422
    %424 = vrot.lane.b32.xlu0 %v277, 96
    %v425 = vpop.permute.xlu0 %424
    %426 = vrot.lane.b32.xlu0 %v278, 96
    %v427 = vpop.permute.xlu0 %426
    %428 = vrot.lane.b32.xlu0 %v279, 96
    %v429 = vpop.permute.xlu0 %428
    %430 = vrot.lane.b32.xlu0 %v280, 96
    %v431 = vpop.permute.xlu0 %430
    %432 = vrot.lane.b32.xlu0 %v281, 96
    %v433 = vpop.permute.xlu0 %432
    %442 = vrot.lane.b32.xlu0 %v274, 112
    %v443 = vpop.permute.xlu0 %442
    %444 = vrot.lane.b32.xlu0 %v275, 112
    %v445 = vpop.permute.xlu0 %444
    %446 = vrot.lane.b32.xlu0 %v276, 112
    %v447 = vpop.permute.xlu0 %446
    %448 = vrot.lane.b32.xlu0 %v277, 112
    %v449 = vpop.permute.xlu0 %448
    %450 = vrot.lane.b32.xlu0 %v278, 112
    %v451 = vpop.permute.xlu0 %450
    %452 = vrot.lane.b32.xlu0 %v279, 112
    %v453 = vpop.permute.xlu0 %452
    %454 = vrot.lane.b32.xlu0 %v280, 112
    %v455 = vpop.permute.xlu0 %454
    %456 = vrot.lane.b32.xlu0 %v281, 112
    %v457 = vpop.permute.xlu0 %456
    %vm466 = vcmask 130048
    %v467 = vsel %vm466, %v274, %v299
    %v468 = vsel %vm466, %v275, %v301
    %v469 = vsel %vm466, %v276, %v303
    %v470 = vsel %vm466, %v277, %v305
    %v471 = vsel %vm466, %v278, %v307
    %v472 = vsel %vm466, %v279, %v309
    %v473 = vsel %vm466, %v280, %v311
    %v474 = vsel %vm466, %v281, %v313
    %vm475 = vcmask 261120
    %v476 = vsel %vm475, %v467, %v323
    %v477 = vsel %vm475, %v468, %v325
    %v478 = vsel %vm475, %v469, %v327
    %v479 = vsel %vm475, %v470, %v329
    %v480 = vsel %vm475, %v471, %v331
    %v481 = vsel %vm475, %v472, %v333
    %v482 = vsel %vm475, %v473, %v335
    %v483 = vsel %vm475, %v474, %v337
    %vm484 = vcmask 392192
    %v485 = vsel %vm484, %v476, %v347
    %v486 = vsel %vm484, %v477, %v349
    %v487 = vsel %vm484, %v478, %v351
    %v488 = vsel %vm484, %v479, %v353
    %v489 = vsel %vm484, %v480, %v355
    %v490 = vsel %vm484, %v481, %v357
    %v491 = vsel %vm484, %v482, %v359
    %v492 = vsel %vm484, %v483, %v361
    %v493 = vsel %vm212, %v485, %v371
    %v494 = vsel %vm212, %v486, %v373
    %v495 = vsel %vm212, %v487, %v375
    %v496 = vsel %vm212, %v488, %v377
    %v497 = vsel %vm212, %v489, %v379
    %v498 = vsel %vm212, %v490, %v381
    %v499 = vsel %vm212, %v491, %v383
    %v500 = vsel %vm212, %v492, %v385
    %vm501 = vcmask 654336
    %v502 = vsel %vm501, %v493, %v395
    %v503 = vsel %vm501, %v494, %v397
    %v504 = vsel %vm501, %v495, %v399
    %v505 = vsel %vm501, %v496, %v401
    %v506 = vsel %vm501, %v497, %v403
    %v507 = vsel %vm501, %v498, %v405
    %v508 = vsel %vm501, %v499, %v407
    %v509 = vsel %vm501, %v500, %v409
    %vm510 = vcmask 785408
    %v511 = vsel %vm510, %v502, %v419
    %v512 = vsel %vm510, %v503, %v421
    %v513 = vsel %vm510, %v504, %v423
    %v514 = vsel %vm510, %v505, %v425
    %v515 = vsel %vm510, %v506, %v427
    %v516 = vsel %vm510, %v507, %v429
    %v517 = vsel %vm510, %v508, %v431
    %v518 = vsel %vm510, %v509, %v433
    %vm519 = vcmask 916480
    %v520 = vsel %vm519, %v511, %v443
    %v521 = vsel %vm519, %v512, %v445
    %v522 = vsel %vm519, %v513, %v447
    %v523 = vsel %vm519, %v514, %v449
    %v524 = vsel %vm519, %v515, %v451
    %v525 = vsel %vm519, %v516, %v453
    %v526 = vsel %vm519, %v517, %v455
    %v527 = vsel %vm519, %v518, %v457
    %v528 = vlaneseq
    %v529 = vshrl.u32 %v528, 7
    %v530 = vadd.s32 %v529, 8
    %v531 = vadd.s32 %v529, 16
    %v532 = vadd.s32 %v529, 24
    %v533 = vadd.s32 %v529, 32
    %v534 = vadd.s32 %v529, 40
    %v535 = vadd.s32 %v529, 48
    %v536 = vadd.s32 %v529, 56
    %v537 = vlaneseq
    %v538 = vand.u32 %v537, 127
    %v539 = vshra.s32 %v538, 4
    %v540 = vshra.s32 %v529, 3
    %v541 = vshra.s32 %v530, 3
    %v542 = vshra.s32 %v531, 3
    %v543 = vshra.s32 %v532, 3
    %v544 = vshra.s32 %v533, 3
    %v545 = vshra.s32 %v534, 3
    %v546 = vshra.s32 %v535, 3
    %v547 = vshra.s32 %v536, 3
    %vm548 = vcmp.eq.s32.totalorder %v539, %v540
    %vm549 = vcmp.eq.s32.totalorder %v539, %v541
    %vm550 = vcmp.eq.s32.totalorder %v539, %v542
    %vm551 = vcmp.eq.s32.totalorder %v539, %v543
    %vm552 = vcmp.eq.s32.totalorder %v539, %v544
    %vm553 = vcmp.eq.s32.totalorder %v539, %v545
    %vm554 = vcmp.eq.s32.totalorder %v539, %v546
    %vm555 = vcmp.eq.s32.totalorder %v539, %v547
    %v556 = vsel %vm548, %v520, 0.0
    %v557 = vsel %vm549, %v521, 0.0
    %v558 = vsel %vm550, %v522, 0.0
    %v559 = vsel %vm551, %v523, 0.0
    %v560 = vsel %vm552, %v524, 0.0
    %v561 = vsel %vm553, %v525, 0.0
    %v562 = vsel %vm554, %v526, 0.0
    %v563 = vsel %vm555, %v527, 0.0
    %v564 = vand.u32 %v538, 15
    %v565 = vshra.s32 %v564, 3
    %vm566 = vcmp.eq.s32.totalorder %v540, %v565
    %vm567 = vcmp.eq.s32.totalorder %v541, %v565
    %v568 = vsel %vm566, 0.0, -1e+30
    %v569 = vsel %vm567, 0.0, -1e+30
    %v571 = vsel %vm212, %v226, 0
    %v574 = vsel %vm212, %v228, 0
    %576 = vmatpush.msra.mxu0 0.0
    %577 = vmatpush.msra.mxu0 0.0
    %578 = vmatpush.msra.mxu0 0.0
    %579 = vmatpush.msra.mxu0 0.0
    %580 = vmatpush.msra.mxu0 0.0
    %581 = vmatpush.msra.mxu0 0.0
    %582 = vmatpush.msra.mxu0 0.0
    %583 = vmatpush.msra.mxu0 0.0
    %584 = vmatpush.msra.mxu0 %v563
    %585 = vmatpush.msra.mxu0 %v562
    %586 = vmatpush.msra.mxu0 %v561
    %587 = vmatpush.msra.mxu0 %v560
    %588 = vmatpush.msra.mxu0 %v559
    %589 = vmatpush.msra.mxu0 %v558
    %590 = vmatpush.msra.mxu0 %v557
    %591 = vmatpush.msra.mxu0 %v556
    %592 = vmatmul.f32.gmra.mxu0 %v571
    %v593 = vpop.f32.mrf.mxu0
    %v594 = vadd.f32 0.0, %v593
    %595 = vmatmul.f32.gmra.mxu0 %v574
    %v596 = vpop.f32.mrf.mxu0
    %v597 = vadd.f32 0.0, %v596
    %598 = vdwg.mxu0
    %v599 = vmul.f32 %v594, 0.35355338
    %v600 = vmul.f32 %v597, 0.35355338
    %v601 = vadd.f32 %v599, %v568
    %v602 = vadd.f32 %v600, %v569
    %603 = vmax.xlane.f32.xlu0 %v601
    %v604 = vpop.xlane.xlu0 %603
    %605 = vmax.xlane.f32.xlu0 %v602
    %v606 = vpop.xlane.xlu0 %605
    %v607 = vsub.f32 %v601, %v604
    %v608 = vsub.f32 %v602, %v606
    %v609 = vmul.f32 %v607, 1.442695
    %v610 = vpow.pop %v609
    %v611 = vmul.f32 %v608, 1.442695
    %v612 = vpow.pop %v611
    %v613 = vadd.s32 %v529, 64
    %v614 = vadd.s32 %v529, 72
    %v615 = vadd.s32 %v529, 80
    %v616 = vadd.s32 %v529, 88
    %v617 = vadd.s32 %v529, 96
    %v618 = vadd.s32 %v529, 104
    %v619 = vadd.s32 %v529, 112
    %v620 = vadd.s32 %v529, 120
    %v621 = vshra.s32 %v529, 4
    %v622 = vshra.s32 %v530, 4
    %v623 = vshra.s32 %v531, 4
    %v624 = vshra.s32 %v532, 4
    %v625 = vshra.s32 %v533, 4
    %v626 = vshra.s32 %v534, 4
    %v627 = vshra.s32 %v535, 4
    %v628 = vshra.s32 %v536, 4
    %v629 = vshra.s32 %v613, 4
    %v630 = vshra.s32 %v614, 4
    %v631 = vshra.s32 %v615, 4
    %v632 = vshra.s32 %v616, 4
    %v633 = vshra.s32 %v617, 4
    %v634 = vshra.s32 %v618, 4
    %v635 = vshra.s32 %v619, 4
    %v636 = vshra.s32 %v620, 4
    %vm637 = vcmp.eq.s32.totalorder %v621, %v539
    %vm638 = vcmp.eq.s32.totalorder %v622, %v539
    %vm639 = vcmp.eq.s32.totalorder %v623, %v539
    %vm640 = vcmp.eq.s32.totalorder %v624, %v539
    %vm641 = vcmp.eq.s32.totalorder %v625, %v539
    %vm642 = vcmp.eq.s32.totalorder %v626, %v539
    %vm643 = vcmp.eq.s32.totalorder %v627, %v539
    %vm644 = vcmp.eq.s32.totalorder %v628, %v539
    %vm645 = vcmp.eq.s32.totalorder %v629, %v539
    %vm646 = vcmp.eq.s32.totalorder %v630, %v539
    %vm647 = vcmp.eq.s32.totalorder %v631, %v539
    %vm648 = vcmp.eq.s32.totalorder %v632, %v539
    %vm649 = vcmp.eq.s32.totalorder %v633, %v539
    %vm650 = vcmp.eq.s32.totalorder %v634, %v539
    %vm651 = vcmp.eq.s32.totalorder %v635, %v539
    %vm652 = vcmp.eq.s32.totalorder %v636, %v539
    %v653 = vsel %vm637, 1.0, 0.0
    %v654 = vsel %vm638, 1.0, 0.0
    %v655 = vsel %vm639, 1.0, 0.0
    %v656 = vsel %vm640, 1.0, 0.0
    %v657 = vsel %vm641, 1.0, 0.0
    %v658 = vsel %vm642, 1.0, 0.0
    %v659 = vsel %vm643, 1.0, 0.0
    %v660 = vsel %vm644, 1.0, 0.0
    %v661 = vsel %vm645, 1.0, 0.0
    %v662 = vsel %vm646, 1.0, 0.0
    %v663 = vsel %vm647, 1.0, 0.0
    %v664 = vsel %vm648, 1.0, 0.0
    %v665 = vsel %vm649, 1.0, 0.0
    %v666 = vsel %vm650, 1.0, 0.0
    %v667 = vsel %vm651, 1.0, 0.0
    %v668 = vsel %vm652, 1.0, 0.0
    %669 = vmatpush.msra.mxu0 %v668
    %670 = vmatpush.msra.mxu0 %v667
    %671 = vmatpush.msra.mxu0 %v666
    %672 = vmatpush.msra.mxu0 %v665
    %673 = vmatpush.msra.mxu0 %v664
    %674 = vmatpush.msra.mxu0 %v663
    %675 = vmatpush.msra.mxu0 %v662
    %676 = vmatpush.msra.mxu0 %v661
    %677 = vmatpush.msra.mxu0 %v660
    %678 = vmatpush.msra.mxu0 %v659
    %679 = vmatpush.msra.mxu0 %v658
    %680 = vmatpush.msra.mxu0 %v657
    %681 = vmatpush.msra.mxu0 %v656
    %682 = vmatpush.msra.mxu0 %v655
    %683 = vmatpush.msra.mxu0 %v654
    %684 = vmatpush.msra.mxu0 %v653
    %685 = vmatmul.f32.gmra.mxu0 %v610
    %v686 = vpop.f32.mrf.mxu0
    %v687 = vadd.f32 0.0, %v686
    %688 = vmatmul.f32.gmra.mxu0 %v612
    %v689 = vpop.f32.mrf.mxu0
    %v690 = vadd.f32 0.0, %v689
    %691 = vdwg.mxu0
    %v692 = vrcp.pop %v687
    %v693 = vrcp.pop %v690
    %v694 = vmul.f32 %v610, %v692
    %v695 = vmul.f32 %v612, %v693
    %v696 = vshra.s32 %v538, 3
    %vm697 = vcmp.eq.s32.totalorder %v621, %v696
    %vm698 = vcmp.eq.s32.totalorder %v622, %v696
    %vm699 = vcmp.eq.s32.totalorder %v623, %v696
    %vm700 = vcmp.eq.s32.totalorder %v624, %v696
    %vm701 = vcmp.eq.s32.totalorder %v625, %v696
    %vm702 = vcmp.eq.s32.totalorder %v626, %v696
    %vm703 = vcmp.eq.s32.totalorder %v627, %v696
    %vm704 = vcmp.eq.s32.totalorder %v628, %v696
    %vm705 = vcmp.eq.s32.totalorder %v629, %v696
    %vm706 = vcmp.eq.s32.totalorder %v630, %v696
    %vm707 = vcmp.eq.s32.totalorder %v631, %v696
    %vm708 = vcmp.eq.s32.totalorder %v632, %v696
    %vm709 = vcmp.eq.s32.totalorder %v633, %v696
    %vm710 = vcmp.eq.s32.totalorder %v634, %v696
    %vm711 = vcmp.eq.s32.totalorder %v635, %v696
    %vm712 = vcmp.eq.s32.totalorder %v636, %v696
    %v713 = vsel %vm697, %v254, 0.0
    %v714 = vsel %vm698, %v256, 0.0
    %v715 = vsel %vm699, %v254, 0.0
    %v716 = vsel %vm700, %v256, 0.0
    %v717 = vsel %vm701, %v254, 0.0
    %v718 = vsel %vm702, %v256, 0.0
    %v719 = vsel %vm703, %v254, 0.0
    %v720 = vsel %vm704, %v256, 0.0
    %v721 = vsel %vm705, %v254, 0.0
    %v722 = vsel %vm706, %v256, 0.0
    %v723 = vsel %vm707, %v254, 0.0
    %v724 = vsel %vm708, %v256, 0.0
    %v725 = vsel %vm709, %v254, 0.0
    %v726 = vsel %vm710, %v256, 0.0
    %v727 = vsel %vm711, %v254, 0.0
    %v728 = vsel %vm712, %v256, 0.0
    %729 = vmatpush.msra.mxu0 %v728
    %730 = vmatpush.msra.mxu0 %v727
    %731 = vmatpush.msra.mxu0 %v726
    %732 = vmatpush.msra.mxu0 %v725
    %733 = vmatpush.msra.mxu0 %v724
    %734 = vmatpush.msra.mxu0 %v723
    %735 = vmatpush.msra.mxu0 %v722
    %736 = vmatpush.msra.mxu0 %v721
    %737 = vmatpush.msra.mxu0 %v720
    %738 = vmatpush.msra.mxu0 %v719
    %739 = vmatpush.msra.mxu0 %v718
    %740 = vmatpush.msra.mxu0 %v717
    %741 = vmatpush.msra.mxu0 %v716
    %742 = vmatpush.msra.mxu0 %v715
    %743 = vmatpush.msra.mxu0 %v714
    %744 = vmatpush.msra.mxu0 %v713
    %745 = vmatmul.f32.gmra.mxu0 %v694
    %v746 = vpop.f32.mrf.mxu0
    %v747 = vadd.f32 0.0, %v746
    %748 = vmatmul.f32.gmra.mxu0 %v695
    %v749 = vpop.f32.mrf.mxu0
    %v750 = vadd.f32 0.0, %v749
    %751 = vdwg.mxu0
    %v752 = vpack.c.bf16 %v750, %v747
    %v753 = vld [vmem:[#allocation4 + $0x1c] sm:$0xf]
    %v754 = vld [vmem:[#allocation4 + $0x3c] sm:$0xf]
    %v755 = vld [vmem:[#allocation4 + $0x5c] sm:$0xf]
    %v756 = vld [vmem:[#allocation4 + $0x7c] sm:$0xf]
    %v757 = vld [vmem:[#allocation4 + $0x9c] sm:$0xf]
    %v758 = vld [vmem:[#allocation4 + $0xbc] sm:$0xf]
    %v759 = vld [vmem:[#allocation4 + $0xdc] sm:$0xf]
    %v760 = vld [vmem:[#allocation4 + $0xfc] sm:$0xf]
    %v761 = vld [vmem:[#allocation10 + $0x3] sm:$0x1]
    %v763 = vperm.slane %v761, 0
    %v773 = vunpack.c.l.b16 %v753
    %v774 = vunpack.c.l.b16 %v754
    %v775 = vunpack.c.l.b16 %v755
    %v776 = vunpack.c.l.b16 %v756
    %v777 = vunpack.c.l.b16 %v757
    %v778 = vunpack.c.l.b16 %v758
    %v779 = vunpack.c.l.b16 %v759
    %v780 = vunpack.c.l.b16 %v760
    %v781 = vpack.c.b16 %v774, %v773
    %v782 = vpack.c.b16 %v776, %v775
    %v783 = vpack.c.b16 %v778, %v777
    %v784 = vpack.c.b16 %v780, %v779
    %v790 = vsel %vm212, %v752, 0
    %792 = vmatpush.bf16.msra.mxu0 0
    %793 = vmatpush.bf16.msra.mxu0 0
    %794 = vmatpush.bf16.msra.mxu0 0
    %795 = vmatpush.bf16.msra.mxu0 0
    %796 = vmatpush.bf16.msra.mxu0 %v784
    %797 = vmatpush.bf16.msra.mxu0 %v783
    %798 = vmatpush.bf16.msra.mxu0 %v782
    %799 = vmatpush.bf16.msra.mxu0 %v781
    %800 = vmatmul.bf16.gmra.mxu0 %v790
    %v801 = vpop.f32.mrf.mxu0
    %v802 = vadd.f32 %v763, %v801
    %v803 = vpop.f32.mrf.mxu0
    %v804 = vadd.f32 %v763, %v803
    %805 = vdwg.mxu0
    %vm806 = vcmp.eq.s32.totalorder %v529, %v538
    %vm807 = vcmp.eq.s32.totalorder %v530, %v538
    %v808 = vsel %vm806, 0.125, 0.0
    %v809 = vsel %vm807, 0.125, 0.0
    %810 = vmatpush.msra.mxu0 %v809
    %811 = vmatpush.msra.mxu0 %v808
    %812 = vmatpush.msra.mxu0 %v809
    %813 = vmatpush.msra.mxu0 %v808
    %814 = vmatpush.msra.mxu0 %v809
    %815 = vmatpush.msra.mxu0 %v808
    %816 = vmatpush.msra.mxu0 %v809
    %817 = vmatpush.msra.mxu0 %v808
    %818 = vmatpush.msra.mxu0 %v809
    %819 = vmatpush.msra.mxu0 %v808
    %820 = vmatpush.msra.mxu0 %v809
    %821 = vmatpush.msra.mxu0 %v808
    %822 = vmatpush.msra.mxu0 %v809
    %823 = vmatpush.msra.mxu0 %v808
    %824 = vmatpush.msra.mxu0 %v809
    %825 = vmatpush.msra.mxu0 %v808
    %826 = vmatmul.f32.gmra.mxu0 %v694
    %v827 = vpop.f32.mrf.mxu0
    %v828 = vadd.f32 0.0, %v827
    %829 = vmatmul.f32.gmra.mxu0 %v695
    %v830 = vpop.f32.mrf.mxu0
    %v831 = vadd.f32 0.0, %v830
    %832 = vdwg.mxu0
    %v833 = vsel %vm466, %v828, 0.0
    %v834 = vsel %vm466, %v831, 0.0
    %835 = vst [vmem:[%s8] sm:$0xff] %v833
    %836 = vst [vmem:[%s8 + $0x8] sm:$0xff] %v834
    %v837 = vld [vmem:[%s1] sm:$0x1]
    %v839 = vperm.slane %v837, 0
    %vm841 = vcmp.eq.s32.totalorder %v529, %v696
    %v842 = vsel %vm841, %v839, 0.0
    %v844 = vsel %vm466, %v842, 0
    %846 = vmatpush.msra.mxu0 0.0
    %847 = vmatpush.msra.mxu0 0.0
    %848 = vmatpush.msra.mxu0 0.0
    %849 = vmatpush.msra.mxu0 0.0
    %850 = vmatpush.msra.mxu0 0.0
    %851 = vmatpush.msra.mxu0 0.0
    %852 = vmatpush.msra.mxu0 0.0
    %853 = vmatpush.msra.mxu0 0.0
    %854 = vmatpush.msra.mxu0 0.0
    %855 = vmatpush.msra.mxu0 0.0
    %856 = vmatpush.msra.mxu0 0.0
    %857 = vmatpush.msra.mxu0 0.0
    %858 = vmatpush.msra.mxu0 0.0
    %859 = vmatpush.msra.mxu0 0.0
    %860 = vmatpush.msra.mxu0 %v804
    %861 = vmatpush.msra.mxu0 %v802
    %862 = vmatmul.f32.gmra.mxu0 %v844
    %v863 = vpop.f32.mrf.mxu0
    %v864 = vadd.f32 0.0, %v863
    %865 = vdwg.mxu0
    %vm866 = vcmask 123904
    %v867 = vsel %vm866, %v842, 0.0
    %868 = vadd.xlane.f32.xlu0 %v867
    %v869 = vpop.xlane.xlu0 %868
    %v870 = vrcp.pop %v869
    %v871 = vmul.f32 %v869, %v870
    %v872 = vsub.f32 1.0, %v871
    %v873 = vmul.f32 %v870, %v872
    %v874 = vadd.f32 %v870, %v873
    %vm875 = vweird.f32 %v869
    %vm876 = vweird.f32 %v870
    %vm877 = vmor %vm875, %vm876
    %v878 = vsel %vm877, %v870, %v874
    %v879 = vand.u32 2147483647, %v869
    %vm880 = vcmp.eq.f32.partialorder %v879, 8.507059e+37
    %v881 = vand.u32 %v869, 2147483648
    %v882 = vor.u32 1.1754944e-38, %v881
    %v883 = vsel %vm880, %v882, %v878
    %v884 = vmul.f32 %v864, %v883
    %v885 = vpack.c.bf16 %v884, %v884
    %v886 = vld [vmem:[#allocation4] sm:$0xff]
    %v887 = vld [vmem:[#allocation4 + $0x8] sm:$0xff]
    %v888 = vld [vmem:[#allocation4 + $0x20] sm:$0xff]
    %v889 = vld [vmem:[#allocation4 + $0x28] sm:$0xff]
    %v890 = vld [vmem:[#allocation4 + $0x40] sm:$0xff]
    %v891 = vld [vmem:[#allocation4 + $0x48] sm:$0xff]
    %v892 = vld [vmem:[#allocation4 + $0x60] sm:$0xff]
    %v893 = vld [vmem:[#allocation4 + $0x68] sm:$0xff]
    %v894 = vld [vmem:[#allocation4 + $0x80] sm:$0xff]
    %v895 = vld [vmem:[#allocation4 + $0x88] sm:$0xff]
    %v896 = vld [vmem:[#allocation4 + $0xa0] sm:$0xff]
    %v897 = vld [vmem:[#allocation4 + $0xa8] sm:$0xff]
    %v898 = vld [vmem:[#allocation4 + $0xc0] sm:$0xff]
    %v899 = vld [vmem:[#allocation4 + $0xc8] sm:$0xff]
    %v900 = vld [vmem:[#allocation4 + $0xe0] sm:$0xff]
    %v901 = vld [vmem:[#allocation4 + $0xe8] sm:$0xff]
    %v902 = vld [vmem:[#allocation10 + $0x4] sm:$0xf]
    %v904 = vperm.slane %v902, 0
    %v905 = vperm.slane %v902, 1
    %v906 = vperm.slane %v902, 2
    %v907 = vperm.slane %v902, 3
    %v928 = vunpack.c.l.b16 %v886
    %v929 = vunpack.c.h.b16 %v886
    %v930 = vunpack.c.l.b16 %v887
    %v931 = vunpack.c.h.b16 %v887
    %v932 = vunpack.c.l.b16 %v888
    %v933 = vunpack.c.h.b16 %v888
    %v934 = vunpack.c.l.b16 %v889
    %v935 = vunpack.c.h.b16 %v889
    %v936 = vunpack.c.l.b16 %v890
    %v937 = vunpack.c.h.b16 %v890
    %v938 = vunpack.c.l.b16 %v891
    %v939 = vunpack.c.h.b16 %v891
    %v940 = vunpack.c.l.b16 %v892
    %v941 = vunpack.c.h.b16 %v892
    %v942 = vunpack.c.l.b16 %v893
    %v943 = vunpack.c.h.b16 %v893
    %v944 = vunpack.c.l.b16 %v894
    %v945 = vunpack.c.h.b16 %v894
    %v946 = vunpack.c.l.b16 %v895
    %v947 = vunpack.c.h.b16 %v895
    %v948 = vunpack.c.l.b16 %v896
    %v949 = vunpack.c.h.b16 %v896
    %v950 = vunpack.c.l.b16 %v897
    %v951 = vunpack.c.h.b16 %v897
    %v952 = vunpack.c.l.b16 %v898
    %v953 = vunpack.c.h.b16 %v898
    %v954 = vunpack.c.l.b16 %v899
    %v955 = vunpack.c.h.b16 %v899
    %v956 = vunpack.c.l.b16 %v900
    %v957 = vunpack.c.h.b16 %v900
    %v958 = vunpack.c.l.b16 %v901
    %v959 = vunpack.c.h.b16 %v901
    %v960 = vpack.c.b16 %v932, %v928
    %v961 = vpack.c.b16 %v933, %v929
    %v962 = vpack.c.b16 %v934, %v930
    %v963 = vpack.c.b16 %v935, %v931
    %v964 = vpack.c.b16 %v940, %v936
    %v965 = vpack.c.b16 %v941, %v937
    %v966 = vpack.c.b16 %v942, %v938
    %v967 = vpack.c.b16 %v943, %v939
    %v968 = vpack.c.b16 %v948, %v944
    %v969 = vpack.c.b16 %v949, %v945
    %v970 = vpack.c.b16 %v950, %v946
    %v971 = vpack.c.b16 %v951, %v947
    %v972 = vpack.c.b16 %v956, %v952
    %v973 = vpack.c.b16 %v957, %v953
    %v974 = vpack.c.b16 %v958, %v954
    %v975 = vpack.c.b16 %v959, %v955
    %v993 = vsel %vm212, %v885, 0
    %995 = vmatpush.bf16.msra.mxu0 0
    %996 = vmatpush.bf16.msra.mxu0 0
    %997 = vmatpush.bf16.msra.mxu0 0
    %998 = vmatpush.bf16.msra.mxu0 0
    %999 = vmatpush.bf16.msra.mxu0 %v972
    %1000 = vmatpush.bf16.msra.mxu0 %v968
    %1001 = vmatpush.bf16.msra.mxu0 %v964
    %1002 = vmatpush.bf16.msra.mxu0 %v960
    %1003 = vmatmul.bf16.gmra.mxu0 %v993
    %v1004 = vpop.f32.mrf.mxu0
    %v1005 = vadd.f32 %v904, %v1004
    %v1006 = vpop.f32.mrf.mxu0
    %1007 = vdwg.mxu0
    %1008 = vmatpush.bf16.msra.mxu0 0
    %1009 = vmatpush.bf16.msra.mxu0 0
    %1010 = vmatpush.bf16.msra.mxu0 0
    %1011 = vmatpush.bf16.msra.mxu0 0
    %1012 = vmatpush.bf16.msra.mxu0 %v973
    %1013 = vmatpush.bf16.msra.mxu0 %v969
    %1014 = vmatpush.bf16.msra.mxu0 %v965
    %1015 = vmatpush.bf16.msra.mxu0 %v961
    %1016 = vmatmul.bf16.gmra.mxu0 %v993
    %v1017 = vpop.f32.mrf.mxu0
    %v1018 = vadd.f32 %v905, %v1017
    %v1019 = vpop.f32.mrf.mxu0
    %1020 = vdwg.mxu0
    %1021 = vmatpush.bf16.msra.mxu0 0
    %1022 = vmatpush.bf16.msra.mxu0 0
    %1023 = vmatpush.bf16.msra.mxu0 0
    %1024 = vmatpush.bf16.msra.mxu0 0
    %1025 = vmatpush.bf16.msra.mxu0 %v974
    %1026 = vmatpush.bf16.msra.mxu0 %v970
    %1027 = vmatpush.bf16.msra.mxu0 %v966
    %1028 = vmatpush.bf16.msra.mxu0 %v962
    %1029 = vmatmul.bf16.gmra.mxu0 %v993
    %v1030 = vpop.f32.mrf.mxu0
    %v1031 = vadd.f32 %v906, %v1030
    %v1032 = vpop.f32.mrf.mxu0
    %1033 = vdwg.mxu0
    %1034 = vmatpush.bf16.msra.mxu0 0
    %1035 = vmatpush.bf16.msra.mxu0 0
    %1036 = vmatpush.bf16.msra.mxu0 0
    %1037 = vmatpush.bf16.msra.mxu0 0
    %1038 = vmatpush.bf16.msra.mxu0 %v975
    %1039 = vmatpush.bf16.msra.mxu0 %v971
    %1040 = vmatpush.bf16.msra.mxu0 %v967
    %1041 = vmatpush.bf16.msra.mxu0 %v963
    %1042 = vmatmul.bf16.gmra.mxu0 %v993
    %v1043 = vpop.f32.mrf.mxu0
    %v1044 = vadd.f32 %v907, %v1043
    %v1045 = vpop.f32.mrf.mxu0
    %1046 = vdwg.mxu0
    %v1047 = vmax.f32 %v1005, 0.0
    %v1048 = vmax.f32 %v1018, 0.0
    %v1049 = vmax.f32 %v1031, 0.0
    %v1050 = vmax.f32 %v1044, 0.0
    %v1051 = vpack.c.bf16 %v1047, %v1047
    %v1052 = vpack.c.bf16 %v1048, %v1048
    %v1053 = vpack.c.bf16 %v1049, %v1049
    %v1054 = vpack.c.bf16 %v1050, %v1050
    %v1055 = vld [vmem:[#allocation6] sm:$0xff]
    %v1056 = vld [vmem:[#allocation6 + $0x8] sm:$0xff]
    %v1057 = vld [vmem:[#allocation6 + $0x10] sm:$0xff]
    %v1058 = vld [vmem:[#allocation6 + $0x18] sm:$0xff]
    %v1059 = vld [vmem:[#allocation6 + $0x20] sm:$0xff]
    %v1060 = vld [vmem:[#allocation6 + $0x28] sm:$0xff]
    %v1061 = vld [vmem:[#allocation6 + $0x30] sm:$0xff]
    %v1062 = vld [vmem:[#allocation6 + $0x38] sm:$0xff]
    %v1063 = vld [vmem:[#allocation6 + $0x40] sm:$0xff]
    %v1064 = vld [vmem:[#allocation6 + $0x48] sm:$0xff]
    %v1065 = vld [vmem:[#allocation6 + $0x50] sm:$0xff]
    %v1066 = vld [vmem:[#allocation6 + $0x58] sm:$0xff]
    %v1067 = vld [vmem:[#allocation6 + $0x60] sm:$0xff]
    %v1068 = vld [vmem:[#allocation6 + $0x68] sm:$0xff]
    %v1069 = vld [vmem:[#allocation6 + $0x70] sm:$0xff]
    %v1070 = vld [vmem:[#allocation6 + $0x78] sm:$0xff]
    %v1071 = vld [vmem:[#allocation6 + $0x80] sm:$0xff]
    %v1072 = vld [vmem:[#allocation6 + $0x88] sm:$0xff]
    %v1073 = vld [vmem:[#allocation6 + $0x90] sm:$0xff]
    %v1074 = vld [vmem:[#allocation6 + $0x98] sm:$0xff]
    %v1075 = vld [vmem:[#allocation6 + $0xa0] sm:$0xff]
    %v1076 = vld [vmem:[#allocation6 + $0xa8] sm:$0xff]
    %v1077 = vld [vmem:[#allocation6 + $0xb0] sm:$0xff]
    %v1078 = vld [vmem:[#allocation6 + $0xb8] sm:$0xff]
    %v1079 = vld [vmem:[#allocation6 + $0xc0] sm:$0xff]
    %v1080 = vld [vmem:[#allocation6 + $0xc8] sm:$0xff]
    %v1081 = vld [vmem:[#allocation6 + $0xd0] sm:$0xff]
    %v1082 = vld [vmem:[#allocation6 + $0xd8] sm:$0xff]
    %v1083 = vld [vmem:[#allocation6 + $0xe0] sm:$0xff]
    %v1084 = vld [vmem:[#allocation6 + $0xe8] sm:$0xff]
    %v1085 = vld [vmem:[#allocation6 + $0xf0] sm:$0xff]
    %v1086 = vld [vmem:[#allocation6 + $0xf8] sm:$0xff]
    %v1087 = vld [vmem:[#allocation6 + $0x100] sm:$0xff]
    %v1088 = vld [vmem:[#allocation6 + $0x108] sm:$0xff]
    %v1089 = vld [vmem:[#allocation6 + $0x110] sm:$0xff]
    %v1090 = vld [vmem:[#allocation6 + $0x118] sm:$0xff]
    %v1091 = vld [vmem:[#allocation6 + $0x120] sm:$0xff]
    %v1092 = vld [vmem:[#allocation6 + $0x128] sm:$0xff]
    %v1093 = vld [vmem:[#allocation6 + $0x130] sm:$0xff]
    %v1094 = vld [vmem:[#allocation6 + $0x138] sm:$0xff]
    %v1095 = vld [vmem:[#allocation6 + $0x140] sm:$0xff]
    %v1096 = vld [vmem:[#allocation6 + $0x148] sm:$0xff]
    %v1097 = vld [vmem:[#allocation6 + $0x150] sm:$0xff]
    %v1098 = vld [vmem:[#allocation6 + $0x158] sm:$0xff]
    %v1099 = vld [vmem:[#allocation6 + $0x160] sm:$0xff]
    %v1100 = vld [vmem:[#allocation6 + $0x168] sm:$0xff]
    %v1101 = vld [vmem:[#allocation6 + $0x170] sm:$0xff]
    %v1102 = vld [vmem:[#allocation6 + $0x178] sm:$0xff]
    %v1103 = vld [vmem:[#allocation6 + $0x180] sm:$0xff]
    %v1104 = vld [vmem:[#allocation6 + $0x188] sm:$0xff]
    %v1105 = vld [vmem:[#allocation6 + $0x190] sm:$0xff]
    %v1106 = vld [vmem:[#allocation6 + $0x198] sm:$0xff]
    %v1107 = vld [vmem:[#allocation6 + $0x1a0] sm:$0xff]
    %v1108 = vld [vmem:[#allocation6 + $0x1a8] sm:$0xff]
    %v1109 = vld [vmem:[#allocation6 + $0x1b0] sm:$0xff]
    %v1110 = vld [vmem:[#allocation6 + $0x1b8] sm:$0xff]
    %v1111 = vld [vmem:[#allocation6 + $0x1c0] sm:$0xff]
    %v1112 = vld [vmem:[#allocation6 + $0x1c8] sm:$0xff]
    %v1113 = vld [vmem:[#allocation6 + $0x1d0] sm:$0xff]
    %v1114 = vld [vmem:[#allocation6 + $0x1d8] sm:$0xff]
    %v1115 = vld [vmem:[#allocation6 + $0x1e0] sm:$0xff]
    %v1116 = vld [vmem:[#allocation6 + $0x1e8] sm:$0xff]
    %v1117 = vld [vmem:[#allocation6 + $0x1f0] sm:$0xff]
    %v1118 = vld [vmem:[#allocation6 + $0x1f8] sm:$0xff]
    %v1119 = vld [vmem:[#allocation10 + $0x8] sm:$0x3]
    %v1121 = vperm.slane %v1119, 0
    %v1122 = vperm.slane %v1119, 1
    %v1189 = vunpack.c.l.b16 %v1055
    %v1190 = vunpack.c.h.b16 %v1055
    %v1191 = vunpack.c.l.b16 %v1056
    %v1192 = vunpack.c.h.b16 %v1056
    %v1193 = vunpack.c.l.b16 %v1057
    %v1194 = vunpack.c.h.b16 %v1057
    %v1195 = vunpack.c.l.b16 %v1058
    %v1196 = vunpack.c.h.b16 %v1058
    %v1197 = vunpack.c.l.b16 %v1059
    %v1198 = vunpack.c.h.b16 %v1059
    %v1199 = vunpack.c.l.b16 %v1060
    %v1200 = vunpack.c.h.b16 %v1060
    %v1201 = vunpack.c.l.b16 %v1061
    %v1202 = vunpack.c.h.b16 %v1061
    %v1203 = vunpack.c.l.b16 %v1062
    %v1204 = vunpack.c.h.b16 %v1062
    %v1205 = vunpack.c.l.b16 %v1063
    %v1206 = vunpack.c.h.b16 %v1063
    %v1207 = vunpack.c.l.b16 %v1064
    %v1208 = vunpack.c.h.b16 %v1064
    %v1209 = vunpack.c.l.b16 %v1065
    %v1210 = vunpack.c.h.b16 %v1065
    %v1211 = vunpack.c.l.b16 %v1066
    %v1212 = vunpack.c.h.b16 %v1066
    %v1213 = vunpack.c.l.b16 %v1067
    %v1214 = vunpack.c.h.b16 %v1067
    %v1215 = vunpack.c.l.b16 %v1068
    %v1216 = vunpack.c.h.b16 %v1068
    %v1217 = vunpack.c.l.b16 %v1069
    %v1218 = vunpack.c.h.b16 %v1069
    %v1219 = vunpack.c.l.b16 %v1070
    %v1220 = vunpack.c.h.b16 %v1070
    %v1221 = vunpack.c.l.b16 %v1071
    %v1222 = vunpack.c.h.b16 %v1071
    %v1223 = vunpack.c.l.b16 %v1072
    %v1224 = vunpack.c.h.b16 %v1072
    %v1225 = vunpack.c.l.b16 %v1073
    %v1226 = vunpack.c.h.b16 %v1073
    %v1227 = vunpack.c.l.b16 %v1074
    %v1228 = vunpack.c.h.b16 %v1074
    %v1229 = vunpack.c.l.b16 %v1075
    %v1230 = vunpack.c.h.b16 %v1075
    %v1231 = vunpack.c.l.b16 %v1076
    %v1232 = vunpack.c.h.b16 %v1076
    %v1233 = vunpack.c.l.b16 %v1077
    %v1234 = vunpack.c.h.b16 %v1077
    %v1235 = vunpack.c.l.b16 %v1078
    %v1236 = vunpack.c.h.b16 %v1078
    %v1237 = vunpack.c.l.b16 %v1079
    %v1238 = vunpack.c.h.b16 %v1079
    %v1239 = vunpack.c.l.b16 %v1080
    %v1240 = vunpack.c.h.b16 %v1080
    %v1241 = vunpack.c.l.b16 %v1081
    %v1242 = vunpack.c.h.b16 %v1081
    %v1243 = vunpack.c.l.b16 %v1082
    %v1244 = vunpack.c.h.b16 %v1082
    %v1245 = vunpack.c.l.b16 %v1083
    %v1246 = vunpack.c.h.b16 %v1083
    %v1247 = vunpack.c.l.b16 %v1084
    %v1248 = vunpack.c.h.b16 %v1084
    %v1249 = vunpack.c.l.b16 %v1085
    %v1250 = vunpack.c.h.b16 %v1085
    %v1251 = vunpack.c.l.b16 %v1086
    %v1252 = vunpack.c.h.b16 %v1086
    %v1253 = vunpack.c.l.b16 %v1087
    %v1254 = vunpack.c.h.b16 %v1087
    %v1255 = vunpack.c.l.b16 %v1088
    %v1256 = vunpack.c.h.b16 %v1088
    %v1257 = vunpack.c.l.b16 %v1089
    %v1258 = vunpack.c.h.b16 %v1089
    %v1259 = vunpack.c.l.b16 %v1090
    %v1260 = vunpack.c.h.b16 %v1090
    %v1261 = vunpack.c.l.b16 %v1091
    %v1262 = vunpack.c.h.b16 %v1091
    %v1263 = vunpack.c.l.b16 %v1092
    %v1264 = vunpack.c.h.b16 %v1092
    %v1265 = vunpack.c.l.b16 %v1093
    %v1266 = vunpack.c.h.b16 %v1093
    %v1267 = vunpack.c.l.b16 %v1094
    %v1268 = vunpack.c.h.b16 %v1094
    %v1269 = vunpack.c.l.b16 %v1095
    %v1270 = vunpack.c.h.b16 %v1095
    %v1271 = vunpack.c.l.b16 %v1096
    %v1272 = vunpack.c.h.b16 %v1096
    %v1273 = vunpack.c.l.b16 %v1097
    %v1274 = vunpack.c.h.b16 %v1097
    %v1275 = vunpack.c.l.b16 %v1098
    %v1276 = vunpack.c.h.b16 %v1098
    %v1277 = vunpack.c.l.b16 %v1099
    %v1278 = vunpack.c.h.b16 %v1099
    %v1279 = vunpack.c.l.b16 %v1100
    %v1280 = vunpack.c.h.b16 %v1100
    %v1281 = vunpack.c.l.b16 %v1101
    %v1282 = vunpack.c.h.b16 %v1101
    %v1283 = vunpack.c.l.b16 %v1102
    %v1284 = vunpack.c.h.b16 %v1102
    %v1285 = vunpack.c.l.b16 %v1103
    %v1286 = vunpack.c.h.b16 %v1103
    %v1287 = vunpack.c.l.b16 %v1104
    %v1288 = vunpack.c.h.b16 %v1104
    %v1289 = vunpack.c.l.b16 %v1105
    %v1290 = vunpack.c.h.b16 %v1105
    %v1291 = vunpack.c.l.b16 %v1106
    %v1292 = vunpack.c.h.b16 %v1106
    %v1293 = vunpack.c.l.b16 %v1107
    %v1294 = vunpack.c.h.b16 %v1107
    %v1295 = vunpack.c.l.b16 %v1108
    %v1296 = vunpack.c.h.b16 %v1108
    %v1297 = vunpack.c.l.b16 %v1109
    %v1298 = vunpack.c.h.b16 %v1109
    %v1299 = vunpack.c.l.b16 %v1110
    %v1300 = vunpack.c.h.b16 %v1110
    %v1301 = vunpack.c.l.b16 %v1111
    %v1302 = vunpack.c.h.b16 %v1111
    %v1303 = vunpack.c.l.b16 %v1112
    %v1304 = vunpack.c.h.b16 %v1112
    %v1305 = vunpack.c.l.b16 %v1113
    %v1306 = vunpack.c.h.b16 %v1113
    %v1307 = vunpack.c.l.b16 %v1114
    %v1308 = vunpack.c.h.b16 %v1114
    %v1309 = vunpack.c.l.b16 %v1115
    %v1310 = vunpack.c.h.b16 %v1115
    %v1311 = vunpack.c.l.b16 %v1116
    %v1312 = vunpack.c.h.b16 %v1116
    %v1313 = vunpack.c.l.b16 %v1117
    %v1314 = vunpack.c.h.b16 %v1117
    %v1315 = vunpack.c.l.b16 %v1118
    %v1316 = vunpack.c.h.b16 %v1118
    %v1317 = vpack.c.b16 %v1191, %v1189
    %v1318 = vpack.c.b16 %v1192, %v1190
    %v1319 = vpack.c.b16 %v1195, %v1193
    %v1320 = vpack.c.b16 %v1196, %v1194
    %v1321 = vpack.c.b16 %v1199, %v1197
    %v1322 = vpack.c.b16 %v1200, %v1198
    %v1323 = vpack.c.b16 %v1203, %v1201
    %v1324 = vpack.c.b16 %v1204, %v1202
    %v1325 = vpack.c.b16 %v1207, %v1205
    %v1326 = vpack.c.b16 %v1208, %v1206
    %v1327 = vpack.c.b16 %v1211, %v1209
    %v1328 = vpack.c.b16 %v1212, %v1210
    %v1329 = vpack.c.b16 %v1215, %v1213
    %v1330 = vpack.c.b16 %v1216, %v1214
    %v1331 = vpack.c.b16 %v1219, %v1217
    %v1332 = vpack.c.b16 %v1220, %v1218
    %v1333 = vpack.c.b16 %v1223, %v1221
    %v1334 = vpack.c.b16 %v1224, %v1222
    %v1335 = vpack.c.b16 %v1227, %v1225
    %v1336 = vpack.c.b16 %v1228, %v1226
    %v1337 = vpack.c.b16 %v1231, %v1229
    %v1338 = vpack.c.b16 %v1232, %v1230
    %v1339 = vpack.c.b16 %v1235, %v1233
    %v1340 = vpack.c.b16 %v1236, %v1234
    %v1341 = vpack.c.b16 %v1239, %v1237
    %v1342 = vpack.c.b16 %v1240, %v1238
    %v1343 = vpack.c.b16 %v1243, %v1241
    %v1344 = vpack.c.b16 %v1244, %v1242
    %v1345 = vpack.c.b16 %v1247, %v1245
    %v1346 = vpack.c.b16 %v1248, %v1246
    %v1347 = vpack.c.b16 %v1251, %v1249
    %v1348 = vpack.c.b16 %v1252, %v1250
    %v1349 = vpack.c.b16 %v1255, %v1253
    %v1350 = vpack.c.b16 %v1256, %v1254
    %v1351 = vpack.c.b16 %v1259, %v1257
    %v1352 = vpack.c.b16 %v1260, %v1258
    %v1353 = vpack.c.b16 %v1263, %v1261
    %v1354 = vpack.c.b16 %v1264, %v1262
    %v1355 = vpack.c.b16 %v1267, %v1265
    %v1356 = vpack.c.b16 %v1268, %v1266
    %v1357 = vpack.c.b16 %v1271, %v1269
    %v1358 = vpack.c.b16 %v1272, %v1270
    %v1359 = vpack.c.b16 %v1275, %v1273
    %v1360 = vpack.c.b16 %v1276, %v1274
    %v1361 = vpack.c.b16 %v1279, %v1277
    %v1362 = vpack.c.b16 %v1280, %v1278
    %v1363 = vpack.c.b16 %v1283, %v1281
    %v1364 = vpack.c.b16 %v1284, %v1282
    %v1365 = vpack.c.b16 %v1287, %v1285
    %v1366 = vpack.c.b16 %v1288, %v1286
    %v1367 = vpack.c.b16 %v1291, %v1289
    %v1368 = vpack.c.b16 %v1292, %v1290
    %v1369 = vpack.c.b16 %v1295, %v1293
    %v1370 = vpack.c.b16 %v1296, %v1294
    %v1371 = vpack.c.b16 %v1299, %v1297
    %v1372 = vpack.c.b16 %v1300, %v1298
    %v1373 = vpack.c.b16 %v1303, %v1301
    %v1374 = vpack.c.b16 %v1304, %v1302
    %v1375 = vpack.c.b16 %v1307, %v1305
    %v1376 = vpack.c.b16 %v1308, %v1306
    %v1377 = vpack.c.b16 %v1311, %v1309
    %v1378 = vpack.c.b16 %v1312, %v1310
    %v1379 = vpack.c.b16 %v1315, %v1313
    %v1380 = vpack.c.b16 %v1316, %v1314
    %1445 = vmatpush.bf16.msra.mxu0 %v1331
    %1446 = vmatpush.bf16.msra.mxu0 %v1329
    %1447 = vmatpush.bf16.msra.mxu0 %v1327
    %1448 = vmatpush.bf16.msra.mxu0 %v1325
    %1449 = vmatpush.bf16.msra.mxu0 %v1323
    %1450 = vmatpush.bf16.msra.mxu0 %v1321
    %1451 = vmatpush.bf16.msra.mxu0 %v1319
    %1452 = vmatpush.bf16.msra.mxu0 %v1317
    %1453 = vmatmul.bf16.gmra.mxu0 %v1051
    %v1454 = vpop.f32.mrf.mxu0
    %v1455 = vadd.f32 %v1121, %v1454
    %v1456 = vpop.f32.mrf.mxu0
    %1457 = vdwg.mxu0
    %1458 = vmatpush.bf16.msra.mxu0 %v1347
    %1459 = vmatpush.bf16.msra.mxu0 %v1345
    %1460 = vmatpush.bf16.msra.mxu0 %v1343
    %1461 = vmatpush.bf16.msra.mxu0 %v1341
    %1462 = vmatpush.bf16.msra.mxu0 %v1339
    %1463 = vmatpush.bf16.msra.mxu0 %v1337
    %1464 = vmatpush.bf16.msra.mxu0 %v1335
    %1465 = vmatpush.bf16.msra.mxu0 %v1333
    %1466 = vmatmul.bf16.gmra.mxu0 %v1052
    %v1467 = vpop.f32.mrf.mxu0
    %v1468 = vadd.f32 %v1455, %v1467
    %v1469 = vpop.f32.mrf.mxu0
    %1470 = vdwg.mxu0
    %1471 = vmatpush.bf16.msra.mxu0 %v1363
    %1472 = vmatpush.bf16.msra.mxu0 %v1361
    %1473 = vmatpush.bf16.msra.mxu0 %v1359
    %1474 = vmatpush.bf16.msra.mxu0 %v1357
    %1475 = vmatpush.bf16.msra.mxu0 %v1355
    %1476 = vmatpush.bf16.msra.mxu0 %v1353
    %1477 = vmatpush.bf16.msra.mxu0 %v1351
    %1478 = vmatpush.bf16.msra.mxu0 %v1349
    %1479 = vmatmul.bf16.gmra.mxu0 %v1053
    %v1480 = vpop.f32.mrf.mxu0
    %v1481 = vadd.f32 %v1468, %v1480
    %v1482 = vpop.f32.mrf.mxu0
    %1483 = vdwg.mxu0
    %1484 = vmatpush.bf16.msra.mxu0 %v1379
    %1485 = vmatpush.bf16.msra.mxu0 %v1377
    %1486 = vmatpush.bf16.msra.mxu0 %v1375
    %1487 = vmatpush.bf16.msra.mxu0 %v1373
    %1488 = vmatpush.bf16.msra.mxu0 %v1371
    %1489 = vmatpush.bf16.msra.mxu0 %v1369
    %1490 = vmatpush.bf16.msra.mxu0 %v1367
    %1491 = vmatpush.bf16.msra.mxu0 %v1365
    %1492 = vmatmul.bf16.gmra.mxu0 %v1054
    %v1493 = vpop.f32.mrf.mxu0
    %v1494 = vadd.f32 %v1481, %v1493
    %v1495 = vpop.f32.mrf.mxu0
    %1496 = vdwg.mxu0
    %1497 = vmatpush.bf16.msra.mxu0 %v1332
    %1498 = vmatpush.bf16.msra.mxu0 %v1330
    %1499 = vmatpush.bf16.msra.mxu0 %v1328
    %1500 = vmatpush.bf16.msra.mxu0 %v1326
    %1501 = vmatpush.bf16.msra.mxu0 %v1324
    %1502 = vmatpush.bf16.msra.mxu0 %v1322
    %1503 = vmatpush.bf16.msra.mxu0 %v1320
    %1504 = vmatpush.bf16.msra.mxu0 %v1318
    %1505 = vmatmul.bf16.gmra.mxu0 %v1051
    %v1506 = vpop.f32.mrf.mxu0
    %v1507 = vadd.f32 %v1122, %v1506
    %v1508 = vpop.f32.mrf.mxu0
    %1509 = vdwg.mxu0
    %1510 = vmatpush.bf16.msra.mxu0 %v1348
    %1511 = vmatpush.bf16.msra.mxu0 %v1346
    %1512 = vmatpush.bf16.msra.mxu0 %v1344
    %1513 = vmatpush.bf16.msra.mxu0 %v1342
    %1514 = vmatpush.bf16.msra.mxu0 %v1340
    %1515 = vmatpush.bf16.msra.mxu0 %v1338
    %1516 = vmatpush.bf16.msra.mxu0 %v1336
    %1517 = vmatpush.bf16.msra.mxu0 %v1334
    %1518 = vmatmul.bf16.gmra.mxu0 %v1052
    %v1519 = vpop.f32.mrf.mxu0
    %v1520 = vadd.f32 %v1507, %v1519
    %v1521 = vpop.f32.mrf.mxu0
    %1522 = vdwg.mxu0
    %1523 = vmatpush.bf16.msra.mxu0 %v1364
    %1524 = vmatpush.bf16.msra.mxu0 %v1362
    %1525 = vmatpush.bf16.msra.mxu0 %v1360
    %1526 = vmatpush.bf16.msra.mxu0 %v1358
    %1527 = vmatpush.bf16.msra.mxu0 %v1356
    %1528 = vmatpush.bf16.msra.mxu0 %v1354
    %1529 = vmatpush.bf16.msra.mxu0 %v1352
    %1530 = vmatpush.bf16.msra.mxu0 %v1350
    %1531 = vmatmul.bf16.gmra.mxu0 %v1053
    %v1532 = vpop.f32.mrf.mxu0
    %v1533 = vadd.f32 %v1520, %v1532
    %v1534 = vpop.f32.mrf.mxu0
    %1535 = vdwg.mxu0
    %1536 = vmatpush.bf16.msra.mxu0 %v1380
    %1537 = vmatpush.bf16.msra.mxu0 %v1378
    %1538 = vmatpush.bf16.msra.mxu0 %v1376
    %1539 = vmatpush.bf16.msra.mxu0 %v1374
    %1540 = vmatpush.bf16.msra.mxu0 %v1372
    %1541 = vmatpush.bf16.msra.mxu0 %v1370
    %1542 = vmatpush.bf16.msra.mxu0 %v1368
    %1543 = vmatpush.bf16.msra.mxu0 %v1366
    %1544 = vmatmul.bf16.gmra.mxu0 %v1054
    %v1545 = vpop.f32.mrf.mxu0
    %v1546 = vadd.f32 %v1533, %v1545
    %v1547 = vpop.f32.mrf.mxu0
    %1548 = vdwg.mxu0
    %v1549 = vtanh.pop %v1494
    %v1550 = vtanh.pop %v1546
    %v1551 = vpack.c.bf16 %v1549, %v1549
    %v1552 = vpack.c.bf16 %v1550, %v1550
    %v1553 = vld [vmem:[#allocation7] sm:$0xff]
    %v1554 = vld [vmem:[#allocation7 + $0x8] sm:$0xf]
    %v1555 = vld [vmem:[#allocation7 + $0xc] sm:$0xff]
    %v1556 = vld [vmem:[#allocation7 + $0x14] sm:$0xf]
    %v1557 = vld [vmem:[#allocation7 + $0x18] sm:$0xff]
    %v1558 = vld [vmem:[#allocation7 + $0x20] sm:$0xf]
    %v1559 = vld [vmem:[#allocation7 + $0x24] sm:$0xff]
    %v1560 = vld [vmem:[#allocation7 + $0x2c] sm:$0xf]
    %v1561 = vld [vmem:[#allocation7 + $0x30] sm:$0xff]
    %v1562 = vld [vmem:[#allocation7 + $0x38] sm:$0xf]
    %v1563 = vld [vmem:[#allocation7 + $0x3c] sm:$0xff]
    %v1564 = vld [vmem:[#allocation7 + $0x44] sm:$0xf]
    %v1565 = vld [vmem:[#allocation7 + $0x48] sm:$0xff]
    %v1566 = vld [vmem:[#allocation7 + $0x50] sm:$0xf]
    %v1567 = vld [vmem:[#allocation7 + $0x54] sm:$0xff]
    %v1568 = vld [vmem:[#allocation7 + $0x5c] sm:$0xf]
    %v1569 = vld [vmem:[#allocation7 + $0x60] sm:$0xff]
    %v1570 = vld [vmem:[#allocation7 + $0x68] sm:$0xf]
    %v1571 = vld [vmem:[#allocation7 + $0x6c] sm:$0xff]
    %v1572 = vld [vmem:[#allocation7 + $0x74] sm:$0xf]
    %v1573 = vld [vmem:[#allocation7 + $0x78] sm:$0xff]
    %v1574 = vld [vmem:[#allocation7 + $0x80] sm:$0xf]
    %v1575 = vld [vmem:[#allocation7 + $0x84] sm:$0xff]
    %v1576 = vld [vmem:[#allocation7 + $0x8c] sm:$0xf]
    %v1577 = vld [vmem:[#allocation7 + $0x90] sm:$0xff]
    %v1578 = vld [vmem:[#allocation7 + $0x98] sm:$0xf]
    %v1579 = vld [vmem:[#allocation7 + $0x9c] sm:$0xff]
    %v1580 = vld [vmem:[#allocation7 + $0xa4] sm:$0xf]
    %v1581 = vld [vmem:[#allocation7 + $0xa8] sm:$0xff]
    %v1582 = vld [vmem:[#allocation7 + $0xb0] sm:$0xf]
    %v1583 = vld [vmem:[#allocation7 + $0xb4] sm:$0xff]
    %v1584 = vld [vmem:[#allocation7 + $0xbc] sm:$0xf]
    %v1585 = vld [vmem:[#allocation7 + $0xc0] sm:$0xff]
    %v1586 = vld [vmem:[#allocation7 + $0xc8] sm:$0xf]
    %v1587 = vld [vmem:[#allocation7 + $0xcc] sm:$0xff]
    %v1588 = vld [vmem:[#allocation7 + $0xd4] sm:$0xf]
    %v1589 = vld [vmem:[#allocation7 + $0xd8] sm:$0xff]
    %v1590 = vld [vmem:[#allocation7 + $0xe0] sm:$0xf]
    %v1591 = vld [vmem:[#allocation7 + $0xe4] sm:$0xff]
    %v1592 = vld [vmem:[#allocation7 + $0xec] sm:$0xf]
    %v1593 = vld [vmem:[#allocation7 + $0xf0] sm:$0xff]
    %v1594 = vld [vmem:[#allocation7 + $0xf8] sm:$0xf]
    %v1595 = vld [vmem:[#allocation7 + $0xfc] sm:$0xff]
    %v1596 = vld [vmem:[#allocation7 + $0x104] sm:$0xf]
    %v1597 = vld [vmem:[#allocation7 + $0x108] sm:$0xff]
    %v1598 = vld [vmem:[#allocation7 + $0x110] sm:$0xf]
    %v1599 = vld [vmem:[#allocation7 + $0x114] sm:$0xff]
    %v1600 = vld [vmem:[#allocation7 + $0x11c] sm:$0xf]
    %v1601 = vld [vmem:[#allocation7 + $0x120] sm:$0xff]
    %v1602 = vld [vmem:[#allocation7 + $0x128] sm:$0xf]
    %v1603 = vld [vmem:[#allocation7 + $0x12c] sm:$0xff]
    %v1604 = vld [vmem:[#allocation7 + $0x134] sm:$0xf]
    %v1605 = vld [vmem:[#allocation7 + $0x138] sm:$0xff]
    %v1606 = vld [vmem:[#allocation7 + $0x140] sm:$0xf]
    %v1607 = vld [vmem:[#allocation7 + $0x144] sm:$0xff]
    %v1608 = vld [vmem:[#allocation7 + $0x14c] sm:$0xf]
    %v1609 = vld [vmem:[#allocation7 + $0x150] sm:$0xff]
    %v1610 = vld [vmem:[#allocation7 + $0x158] sm:$0xf]
    %v1611 = vld [vmem:[#allocation7 + $0x15c] sm:$0xff]
    %v1612 = vld [vmem:[#allocation7 + $0x164] sm:$0xf]
    %v1613 = vld [vmem:[#allocation7 + $0x168] sm:$0xff]
    %v1614 = vld [vmem:[#allocation7 + $0x170] sm:$0xf]
    %v1615 = vld [vmem:[#allocation7 + $0x174] sm:$0xff]
    %v1616 = vld [vmem:[#allocation7 + $0x17c] sm:$0xf]
    %v1617 = vld [vmem:[#allocation10 + $0xa] sm:$0x7]
    %v1619 = vperm.slane %v1617, 0
    %v1620 = vperm.slane %v1617, 1
    %v1621 = vperm.slane %v1617, 2
    %v1689 = vunpack.c.l.b16 %v1553
    %v1690 = vunpack.c.h.b16 %v1553
    %v1691 = vunpack.c.l.b16 %v1554
    %v1692 = vunpack.c.l.b16 %v1555
    %v1693 = vunpack.c.h.b16 %v1555
    %v1694 = vunpack.c.l.b16 %v1556
    %v1695 = vunpack.c.l.b16 %v1557
    %v1696 = vunpack.c.h.b16 %v1557
    %v1697 = vunpack.c.l.b16 %v1558
    %v1698 = vunpack.c.l.b16 %v1559
    %v1699 = vunpack.c.h.b16 %v1559
    %v1700 = vunpack.c.l.b16 %v1560
    %v1701 = vunpack.c.l.b16 %v1561
    %v1702 = vunpack.c.h.b16 %v1561
    %v1703 = vunpack.c.l.b16 %v1562
    %v1704 = vunpack.c.l.b16 %v1563
    %v1705 = vunpack.c.h.b16 %v1563
    %v1706 = vunpack.c.l.b16 %v1564
    %v1707 = vunpack.c.l.b16 %v1565
    %v1708 = vunpack.c.h.b16 %v1565
    %v1709 = vunpack.c.l.b16 %v1566
    %v1710 = vunpack.c.l.b16 %v1567
    %v1711 = vunpack.c.h.b16 %v1567
    %v1712 = vunpack.c.l.b16 %v1568
    %v1713 = vunpack.c.l.b16 %v1569
    %v1714 = vunpack.c.h.b16 %v1569
    %v1715 = vunpack.c.l.b16 %v1570
    %v1716 = vunpack.c.l.b16 %v1571
    %v1717 = vunpack.c.h.b16 %v1571
    %v1718 = vunpack.c.l.b16 %v1572
    %v1719 = vunpack.c.l.b16 %v1573
    %v1720 = vunpack.c.h.b16 %v1573
    %v1721 = vunpack.c.l.b16 %v1574
    %v1722 = vunpack.c.l.b16 %v1575
    %v1723 = vunpack.c.h.b16 %v1575
    %v1724 = vunpack.c.l.b16 %v1576
    %v1725 = vunpack.c.l.b16 %v1577
    %v1726 = vunpack.c.h.b16 %v1577
    %v1727 = vunpack.c.l.b16 %v1578
    %v1728 = vunpack.c.l.b16 %v1579
    %v1729 = vunpack.c.h.b16 %v1579
    %v1730 = vunpack.c.l.b16 %v1580
    %v1731 = vunpack.c.l.b16 %v1581
    %v1732 = vunpack.c.h.b16 %v1581
    %v1733 = vunpack.c.l.b16 %v1582
    %v1734 = vunpack.c.l.b16 %v1583
    %v1735 = vunpack.c.h.b16 %v1583
    %v1736 = vunpack.c.l.b16 %v1584
    %v1737 = vunpack.c.l.b16 %v1585
    %v1738 = vunpack.c.h.b16 %v1585
    %v1739 = vunpack.c.l.b16 %v1586
    %v1740 = vunpack.c.l.b16 %v1587
    %v1741 = vunpack.c.h.b16 %v1587
    %v1742 = vunpack.c.l.b16 %v1588
    %v1743 = vunpack.c.l.b16 %v1589
    %v1744 = vunpack.c.h.b16 %v1589
    %v1745 = vunpack.c.l.b16 %v1590
    %v1746 = vunpack.c.l.b16 %v1591
    %v1747 = vunpack.c.h.b16 %v1591
    %v1748 = vunpack.c.l.b16 %v1592
    %v1749 = vunpack.c.l.b16 %v1593
    %v1750 = vunpack.c.h.b16 %v1593
    %v1751 = vunpack.c.l.b16 %v1594
    %v1752 = vunpack.c.l.b16 %v1595
    %v1753 = vunpack.c.h.b16 %v1595
    %v1754 = vunpack.c.l.b16 %v1596
    %v1755 = vunpack.c.l.b16 %v1597
    %v1756 = vunpack.c.h.b16 %v1597
    %v1757 = vunpack.c.l.b16 %v1598
    %v1758 = vunpack.c.l.b16 %v1599
    %v1759 = vunpack.c.h.b16 %v1599
    %v1760 = vunpack.c.l.b16 %v1600
    %v1761 = vunpack.c.l.b16 %v1601
    %v1762 = vunpack.c.h.b16 %v1601
    %v1763 = vunpack.c.l.b16 %v1602
    %v1764 = vunpack.c.l.b16 %v1603
    %v1765 = vunpack.c.h.b16 %v1603
    %v1766 = vunpack.c.l.b16 %v1604
    %v1767 = vunpack.c.l.b16 %v1605
    %v1768 = vunpack.c.h.b16 %v1605
    %v1769 = vunpack.c.l.b16 %v1606
    %v1770 = vunpack.c.l.b16 %v1607
    %v1771 = vunpack.c.h.b16 %v1607
    %v1772 = vunpack.c.l.b16 %v1608
    %v1773 = vunpack.c.l.b16 %v1609
    %v1774 = vunpack.c.h.b16 %v1609
    %v1775 = vunpack.c.l.b16 %v1610
    %v1776 = vunpack.c.l.b16 %v1611
    %v1777 = vunpack.c.h.b16 %v1611
    %v1778 = vunpack.c.l.b16 %v1612
    %v1779 = vunpack.c.l.b16 %v1613
    %v1780 = vunpack.c.h.b16 %v1613
    %v1781 = vunpack.c.l.b16 %v1614
    %v1782 = vunpack.c.l.b16 %v1615
    %v1783 = vunpack.c.h.b16 %v1615
    %v1784 = vunpack.c.l.b16 %v1616
    %v1785 = vpack.c.b16 %v1692, %v1689
    %v1786 = vpack.c.b16 %v1693, %v1690
    %v1787 = vpack.c.b16 %v1694, %v1691
    %v1788 = vpack.c.b16 %v1698, %v1695
    %v1789 = vpack.c.b16 %v1699, %v1696
    %v1790 = vpack.c.b16 %v1700, %v1697
    %v1791 = vpack.c.b16 %v1704, %v1701
    %v1792 = vpack.c.b16 %v1705, %v1702
    %v1793 = vpack.c.b16 %v1706, %v1703
    %v1794 = vpack.c.b16 %v1710, %v1707
    %v1795 = vpack.c.b16 %v1711, %v1708
    %v1796 = vpack.c.b16 %v1712, %v1709
    %v1797 = vpack.c.b16 %v1716, %v1713
    %v1798 = vpack.c.b16 %v1717, %v1714
    %v1799 = vpack.c.b16 %v1718, %v1715
    %v1800 = vpack.c.b16 %v1722, %v1719
    %v1801 = vpack.c.b16 %v1723, %v1720
    %v1802 = vpack.c.b16 %v1724, %v1721
    %v1803 = vpack.c.b16 %v1728, %v1725
    %v1804 = vpack.c.b16 %v1729, %v1726
    %v1805 = vpack.c.b16 %v1730, %v1727
    %v1806 = vpack.c.b16 %v1734, %v1731
    %v1807 = vpack.c.b16 %v1735, %v1732
    %v1808 = vpack.c.b16 %v1736, %v1733
    %v1809 = vpack.c.b16 %v1740, %v1737
    %v1810 = vpack.c.b16 %v1741, %v1738
    %v1811 = vpack.c.b16 %v1742, %v1739
    %v1812 = vpack.c.b16 %v1746, %v1743
    %v1813 = vpack.c.b16 %v1747, %v1744
    %v1814 = vpack.c.b16 %v1748, %v1745
    %v1815 = vpack.c.b16 %v1752, %v1749
    %v1816 = vpack.c.b16 %v1753, %v1750
    %v1817 = vpack.c.b16 %v1754, %v1751
    %v1818 = vpack.c.b16 %v1758, %v1755
    %v1819 = vpack.c.b16 %v1759, %v1756
    %v1820 = vpack.c.b16 %v1760, %v1757
    %v1821 = vpack.c.b16 %v1764, %v1761
    %v1822 = vpack.c.b16 %v1765, %v1762
    %v1823 = vpack.c.b16 %v1766, %v1763
    %v1824 = vpack.c.b16 %v1770, %v1767
    %v1825 = vpack.c.b16 %v1771, %v1768
    %v1826 = vpack.c.b16 %v1772, %v1769
    %v1827 = vpack.c.b16 %v1776, %v1773
    %v1828 = vpack.c.b16 %v1777, %v1774
    %v1829 = vpack.c.b16 %v1778, %v1775
    %v1830 = vpack.c.b16 %v1782, %v1779
    %v1831 = vpack.c.b16 %v1783, %v1780
    %v1832 = vpack.c.b16 %v1784, %v1781
    %1881 = vmatpush.bf16.msra.mxu0 %v1806
    %1882 = vmatpush.bf16.msra.mxu0 %v1803
    %1883 = vmatpush.bf16.msra.mxu0 %v1800
    %1884 = vmatpush.bf16.msra.mxu0 %v1797
    %1885 = vmatpush.bf16.msra.mxu0 %v1794
    %1886 = vmatpush.bf16.msra.mxu0 %v1791
    %1887 = vmatpush.bf16.msra.mxu0 %v1788
    %1888 = vmatpush.bf16.msra.mxu0 %v1785
    %1889 = vmatmul.bf16.gmra.mxu0 %v1551
    %v1890 = vpop.f32.mrf.mxu0
    %v1891 = vadd.f32 %v1619, %v1890
    %v1892 = vpop.f32.mrf.mxu0
    %1893 = vdwg.mxu0
    %1894 = vmatpush.bf16.msra.mxu0 %v1830
    %1895 = vmatpush.bf16.msra.mxu0 %v1827
    %1896 = vmatpush.bf16.msra.mxu0 %v1824
    %1897 = vmatpush.bf16.msra.mxu0 %v1821
    %1898 = vmatpush.bf16.msra.mxu0 %v1818
    %1899 = vmatpush.bf16.msra.mxu0 %v1815
    %1900 = vmatpush.bf16.msra.mxu0 %v1812
    %1901 = vmatpush.bf16.msra.mxu0 %v1809
    %1902 = vmatmul.bf16.gmra.mxu0 %v1552
    %v1903 = vpop.f32.mrf.mxu0
    %v1904 = vadd.f32 %v1891, %v1903
    %v1905 = vpop.f32.mrf.mxu0
    %1906 = vdwg.mxu0
    %1907 = vmatpush.bf16.msra.mxu0 %v1807
    %1908 = vmatpush.bf16.msra.mxu0 %v1804
    %1909 = vmatpush.bf16.msra.mxu0 %v1801
    %1910 = vmatpush.bf16.msra.mxu0 %v1798
    %1911 = vmatpush.bf16.msra.mxu0 %v1795
    %1912 = vmatpush.bf16.msra.mxu0 %v1792
    %1913 = vmatpush.bf16.msra.mxu0 %v1789
    %1914 = vmatpush.bf16.msra.mxu0 %v1786
    %1915 = vmatmul.bf16.gmra.mxu0 %v1551
    %v1916 = vpop.f32.mrf.mxu0
    %v1917 = vadd.f32 %v1620, %v1916
    %v1918 = vpop.f32.mrf.mxu0
    %1919 = vdwg.mxu0
    %1920 = vmatpush.bf16.msra.mxu0 %v1831
    %1921 = vmatpush.bf16.msra.mxu0 %v1828
    %1922 = vmatpush.bf16.msra.mxu0 %v1825
    %1923 = vmatpush.bf16.msra.mxu0 %v1822
    %1924 = vmatpush.bf16.msra.mxu0 %v1819
    %1925 = vmatpush.bf16.msra.mxu0 %v1816
    %1926 = vmatpush.bf16.msra.mxu0 %v1813
    %1927 = vmatpush.bf16.msra.mxu0 %v1810
    %1928 = vmatmul.bf16.gmra.mxu0 %v1552
    %v1929 = vpop.f32.mrf.mxu0
    %v1930 = vadd.f32 %v1917, %v1929
    %v1931 = vpop.f32.mrf.mxu0
    %1932 = vdwg.mxu0
    %1933 = vmatpush.bf16.msra.mxu0 %v1808
    %1934 = vmatpush.bf16.msra.mxu0 %v1805
    %1935 = vmatpush.bf16.msra.mxu0 %v1802
    %1936 = vmatpush.bf16.msra.mxu0 %v1799
    %1937 = vmatpush.bf16.msra.mxu0 %v1796
    %1938 = vmatpush.bf16.msra.mxu0 %v1793
    %1939 = vmatpush.bf16.msra.mxu0 %v1790
    %1940 = vmatpush.bf16.msra.mxu0 %v1787
    %1941 = vmatmul.bf16.gmra.mxu0 %v1551
    %v1942 = vpop.f32.mrf.mxu0
    %v1943 = vadd.f32 %v1621, %v1942
    %v1944 = vpop.f32.mrf.mxu0
    %1945 = vdwg.mxu0
    %1946 = vmatpush.bf16.msra.mxu0 %v1832
    %1947 = vmatpush.bf16.msra.mxu0 %v1829
    %1948 = vmatpush.bf16.msra.mxu0 %v1826
    %1949 = vmatpush.bf16.msra.mxu0 %v1823
    %1950 = vmatpush.bf16.msra.mxu0 %v1820
    %1951 = vmatpush.bf16.msra.mxu0 %v1817
    %1952 = vmatpush.bf16.msra.mxu0 %v1814
    %1953 = vmatpush.bf16.msra.mxu0 %v1811
    %1954 = vmatmul.bf16.gmra.mxu0 %v1552
    %v1955 = vpop.f32.mrf.mxu0
    %v1956 = vadd.f32 %v1943, %v1955
    %v1957 = vpop.f32.mrf.mxu0
    %1958 = vdwg.mxu0
    %v1959 = vmax.f32 %v1904, 0.0
    %v1960 = vmax.f32 %v1930, 0.0
    %v1961 = vmax.f32 %v1956, 0.0
    %v1962 = vpack.c.bf16 %v1959, %v1959
    %v1963 = vpack.c.bf16 %v1960, %v1960
    %v1964 = vpack.c.bf16 %v1961, %v1961
    %v1965 = vld [vmem:[#allocation9] sm:$0xf]
    %v1966 = vld [vmem:[#allocation9 + $0x4] sm:$0xf]
    %v1967 = vld [vmem:[#allocation9 + $0x8] sm:$0xf]
    %v1968 = vld [vmem:[#allocation9 + $0xc] sm:$0xf]
    %v1969 = vld [vmem:[#allocation9 + $0x10] sm:$0xf]
    %v1970 = vld [vmem:[#allocation9 + $0x14] sm:$0xf]
    %v1971 = vld [vmem:[#allocation9 + $0x18] sm:$0xf]
    %v1972 = vld [vmem:[#allocation9 + $0x1c] sm:$0xf]
    %v1973 = vld [vmem:[#allocation9 + $0x20] sm:$0xf]
    %v1974 = vld [vmem:[#allocation9 + $0x24] sm:$0xf]
    %v1975 = vld [vmem:[#allocation9 + $0x28] sm:$0xf]
    %v1976 = vld [vmem:[#allocation9 + $0x2c] sm:$0xf]
    %v1977 = vld [vmem:[#allocation9 + $0x30] sm:$0xf]
    %v1978 = vld [vmem:[#allocation9 + $0x34] sm:$0xf]
    %v1979 = vld [vmem:[#allocation9 + $0x38] sm:$0xf]
    %v1980 = vld [vmem:[#allocation9 + $0x3c] sm:$0xf]
    %v1981 = vld [vmem:[#allocation9 + $0x40] sm:$0xf]
    %v1982 = vld [vmem:[#allocation9 + $0x44] sm:$0xf]
    %v1983 = vld [vmem:[#allocation9 + $0x48] sm:$0xf]
    %v1984 = vld [vmem:[#allocation9 + $0x4c] sm:$0xf]
    %v1985 = vld [vmem:[#allocation9 + $0x50] sm:$0xf]
    %v1986 = vld [vmem:[#allocation9 + $0x54] sm:$0xf]
    %v1987 = vld [vmem:[#allocation9 + $0x58] sm:$0xf]
    %v1988 = vld [vmem:[#allocation9 + $0x5c] sm:$0xf]
    %v1989 = vld [vmem:[#allocation9 + $0x60] sm:$0xf]
    %v1990 = vld [vmem:[#allocation9 + $0x64] sm:$0xf]
    %v1991 = vld [vmem:[#allocation9 + $0x68] sm:$0xf]
    %v1992 = vld [vmem:[#allocation9 + $0x6c] sm:$0xf]
    %v1993 = vld [vmem:[#allocation9 + $0x70] sm:$0xf]
    %v1994 = vld [vmem:[#allocation9 + $0x74] sm:$0xf]
    %v1995 = vld [vmem:[#allocation9 + $0x78] sm:$0xf]
    %v1996 = vld [vmem:[#allocation9 + $0x7c] sm:$0xf]
    %v1997 = vld [vmem:[#allocation9 + $0x80] sm:$0xf]
    %v1998 = vld [vmem:[#allocation9 + $0x84] sm:$0xf]
    %v1999 = vld [vmem:[#allocation9 + $0x88] sm:$0xf]
    %v2000 = vld [vmem:[#allocation9 + $0x8c] sm:$0xf]
    %v2001 = vld [vmem:[#allocation9 + $0x90] sm:$0xf]
    %v2002 = vld [vmem:[#allocation9 + $0x94] sm:$0xf]
    %v2003 = vld [vmem:[#allocation9 + $0x98] sm:$0xf]
    %v2004 = vld [vmem:[#allocation9 + $0x9c] sm:$0xf]
    %v2005 = vld [vmem:[#allocation9 + $0xa0] sm:$0xf]
    %v2006 = vld [vmem:[#allocation9 + $0xa4] sm:$0xf]
    %v2007 = vld [vmem:[#allocation9 + $0xa8] sm:$0xf]
    %v2008 = vld [vmem:[#allocation9 + $0xac] sm:$0xf]
    %v2009 = vld [vmem:[#allocation9 + $0xb0] sm:$0xf]
    %v2010 = vld [vmem:[#allocation9 + $0xb4] sm:$0xf]
    %v2011 = vld [vmem:[#allocation9 + $0xb8] sm:$0xf]
    %v2012 = vld [vmem:[#allocation9 + $0xbc] sm:$0xf]
    %v2013 = vld [vmem:[#allocation9 + $0xc0] sm:$0xf]
    %v2014 = vld [vmem:[#allocation9 + $0xc4] sm:$0xf]
    %v2015 = vld [vmem:[#allocation9 + $0xc8] sm:$0xf]
    %v2016 = vld [vmem:[#allocation9 + $0xcc] sm:$0xf]
    %v2017 = vld [vmem:[#allocation9 + $0xd0] sm:$0xf]
    %v2018 = vld [vmem:[#allocation9 + $0xd4] sm:$0xf]
    %v2019 = vld [vmem:[#allocation9 + $0xd8] sm:$0xf]
    %v2020 = vld [vmem:[#allocation9 + $0xdc] sm:$0xf]
    %v2021 = vld [vmem:[#allocation9 + $0xe0] sm:$0xf]
    %v2022 = vld [vmem:[#allocation9 + $0xe4] sm:$0xf]
    %v2023 = vld [vmem:[#allocation9 + $0xe8] sm:$0xf]
    %v2024 = vld [vmem:[#allocation9 + $0xec] sm:$0xf]
    %v2025 = vld [vmem:[#allocation9 + $0xf0] sm:$0xf]
    %v2026 = vld [vmem:[#allocation9 + $0xf4] sm:$0xf]
    %v2027 = vld [vmem:[#allocation9 + $0xf8] sm:$0xf]
    %v2028 = vld [vmem:[#allocation9 + $0xfc] sm:$0xf]
    %v2029 = vld [vmem:[#allocation9 + $0x100] sm:$0xf]
    %v2030 = vld [vmem:[#allocation9 + $0x104] sm:$0xf]
    %v2031 = vld [vmem:[#allocation9 + $0x108] sm:$0xf]
    %v2032 = vld [vmem:[#allocation9 + $0x10c] sm:$0xf]
    %v2033 = vld [vmem:[#allocation9 + $0x110] sm:$0xf]
    %v2034 = vld [vmem:[#allocation9 + $0x114] sm:$0xf]
    %v2035 = vld [vmem:[#allocation9 + $0x118] sm:$0xf]
    %v2036 = vld [vmem:[#allocation9 + $0x11c] sm:$0xf]
    %v2037 = vld [vmem:[#allocation9 + $0x120] sm:$0xf]
    %v2038 = vld [vmem:[#allocation9 + $0x124] sm:$0xf]
    %v2039 = vld [vmem:[#allocation9 + $0x128] sm:$0xf]
    %v2040 = vld [vmem:[#allocation9 + $0x12c] sm:$0xf]
    %v2041 = vld [vmem:[#allocation9 + $0x130] sm:$0xf]
    %v2042 = vld [vmem:[#allocation9 + $0x134] sm:$0xf]
    %v2043 = vld [vmem:[#allocation9 + $0x138] sm:$0xf]
    %v2044 = vld [vmem:[#allocation9 + $0x13c] sm:$0xf]
    %v2045 = vld [vmem:[#allocation10 + $0xd] sm:$0x1]
    %v2047 = vperm.slane %v2045, 0
    %v2129 = vunpack.c.l.b16 %v1965
    %v2130 = vunpack.c.l.b16 %v1966
    %v2131 = vunpack.c.l.b16 %v1967
    %v2132 = vunpack.c.l.b16 %v1968
    %v2133 = vunpack.c.l.b16 %v1969
    %v2134 = vunpack.c.l.b16 %v1970
    %v2135 = vunpack.c.l.b16 %v1971
    %v2136 = vunpack.c.l.b16 %v1972
    %v2137 = vunpack.c.l.b16 %v1973
    %v2138 = vunpack.c.l.b16 %v1974
    %v2139 = vunpack.c.l.b16 %v1975
    %v2140 = vunpack.c.l.b16 %v1976
    %v2141 = vunpack.c.l.b16 %v1977
    %v2142 = vunpack.c.l.b16 %v1978
    %v2143 = vunpack.c.l.b16 %v1979
    %v2144 = vunpack.c.l.b16 %v1980
    %v2145 = vunpack.c.l.b16 %v1981
    %v2146 = vunpack.c.l.b16 %v1982
    %v2147 = vunpack.c.l.b16 %v1983
    %v2148 = vunpack.c.l.b16 %v1984
    %v2149 = vunpack.c.l.b16 %v1985
    %v2150 = vunpack.c.l.b16 %v1986
    %v2151 = vunpack.c.l.b16 %v1987
    %v2152 = vunpack.c.l.b16 %v1988
    %v2153 = vunpack.c.l.b16 %v1989
    %v2154 = vunpack.c.l.b16 %v1990
    %v2155 = vunpack.c.l.b16 %v1991
    %v2156 = vunpack.c.l.b16 %v1992
    %v2157 = vunpack.c.l.b16 %v1993
    %v2158 = vunpack.c.l.b16 %v1994
    %v2159 = vunpack.c.l.b16 %v1995
    %v2160 = vunpack.c.l.b16 %v1996
    %v2161 = vunpack.c.l.b16 %v1997
    %v2162 = vunpack.c.l.b16 %v1998
    %v2163 = vunpack.c.l.b16 %v1999
    %v2164 = vunpack.c.l.b16 %v2000
    %v2165 = vunpack.c.l.b16 %v2001
    %v2166 = vunpack.c.l.b16 %v2002
    %v2167 = vunpack.c.l.b16 %v2003
    %v2168 = vunpack.c.l.b16 %v2004
    %v2169 = vunpack.c.l.b16 %v2005
    %v2170 = vunpack.c.l.b16 %v2006
    %v2171 = vunpack.c.l.b16 %v2007
    %v2172 = vunpack.c.l.b16 %v2008
    %v2173 = vunpack.c.l.b16 %v2009
    %v2174 = vunpack.c.l.b16 %v2010
    %v2175 = vunpack.c.l.b16 %v2011
    %v2176 = vunpack.c.l.b16 %v2012
    %v2177 = vunpack.c.l.b16 %v2013
    %v2178 = vunpack.c.l.b16 %v2014
    %v2179 = vunpack.c.l.b16 %v2015
    %v2180 = vunpack.c.l.b16 %v2016
    %v2181 = vunpack.c.l.b16 %v2017
    %v2182 = vunpack.c.l.b16 %v2018
    %v2183 = vunpack.c.l.b16 %v2019
    %v2184 = vunpack.c.l.b16 %v2020
    %v2185 = vunpack.c.l.b16 %v2021
    %v2186 = vunpack.c.l.b16 %v2022
    %v2187 = vunpack.c.l.b16 %v2023
    %v2188 = vunpack.c.l.b16 %v2024
    %v2189 = vunpack.c.l.b16 %v2025
    %v2190 = vunpack.c.l.b16 %v2026
    %v2191 = vunpack.c.l.b16 %v2027
    %v2192 = vunpack.c.l.b16 %v2028
    %v2193 = vunpack.c.l.b16 %v2029
    %v2194 = vunpack.c.l.b16 %v2030
    %v2195 = vunpack.c.l.b16 %v2031
    %v2196 = vunpack.c.l.b16 %v2032
    %v2197 = vunpack.c.l.b16 %v2033
    %v2198 = vunpack.c.l.b16 %v2034
    %v2199 = vunpack.c.l.b16 %v2035
    %v2200 = vunpack.c.l.b16 %v2036
    %v2201 = vunpack.c.l.b16 %v2037
    %v2202 = vunpack.c.l.b16 %v2038
    %v2203 = vunpack.c.l.b16 %v2039
    %v2204 = vunpack.c.l.b16 %v2040
    %v2205 = vunpack.c.l.b16 %v2041
    %v2206 = vunpack.c.l.b16 %v2042
    %v2207 = vunpack.c.l.b16 %v2043
    %v2208 = vunpack.c.l.b16 %v2044
    %v2209 = vpack.c.b16 %v2130, %v2129
    %v2210 = vpack.c.b16 %v2132, %v2131
    %v2211 = vpack.c.b16 %v2134, %v2133
    %v2212 = vpack.c.b16 %v2136, %v2135
    %v2213 = vpack.c.b16 %v2138, %v2137
    %v2214 = vpack.c.b16 %v2140, %v2139
    %v2215 = vpack.c.b16 %v2142, %v2141
    %v2216 = vpack.c.b16 %v2144, %v2143
    %v2217 = vpack.c.b16 %v2146, %v2145
    %v2218 = vpack.c.b16 %v2148, %v2147
    %v2219 = vpack.c.b16 %v2150, %v2149
    %v2220 = vpack.c.b16 %v2152, %v2151
    %v2221 = vpack.c.b16 %v2154, %v2153
    %v2222 = vpack.c.b16 %v2156, %v2155
    %v2223 = vpack.c.b16 %v2158, %v2157
    %v2224 = vpack.c.b16 %v2160, %v2159
    %v2225 = vpack.c.b16 %v2162, %v2161
    %v2226 = vpack.c.b16 %v2164, %v2163
    %v2227 = vpack.c.b16 %v2166, %v2165
    %v2228 = vpack.c.b16 %v2168, %v2167
    %v2229 = vpack.c.b16 %v2170, %v2169
    %v2230 = vpack.c.b16 %v2172, %v2171
    %v2231 = vpack.c.b16 %v2174, %v2173
    %v2232 = vpack.c.b16 %v2176, %v2175
    %v2233 = vpack.c.b16 %v2178, %v2177
    %v2234 = vpack.c.b16 %v2180, %v2179
    %v2235 = vpack.c.b16 %v2182, %v2181
    %v2236 = vpack.c.b16 %v2184, %v2183
    %v2237 = vpack.c.b16 %v2186, %v2185
    %v2238 = vpack.c.b16 %v2188, %v2187
    %v2239 = vpack.c.b16 %v2190, %v2189
    %v2240 = vpack.c.b16 %v2192, %v2191
    %v2241 = vpack.c.b16 %v2194, %v2193
    %v2242 = vpack.c.b16 %v2196, %v2195
    %v2243 = vpack.c.b16 %v2198, %v2197
    %v2244 = vpack.c.b16 %v2200, %v2199
    %v2245 = vpack.c.b16 %v2202, %v2201
    %v2246 = vpack.c.b16 %v2204, %v2203
    %v2247 = vpack.c.b16 %v2206, %v2205
    %v2248 = vpack.c.b16 %v2208, %v2207
    %2289 = vmatpush.bf16.msra.mxu0 %v2216
    %2290 = vmatpush.bf16.msra.mxu0 %v2215
    %2291 = vmatpush.bf16.msra.mxu0 %v2214
    %2292 = vmatpush.bf16.msra.mxu0 %v2213
    %2293 = vmatpush.bf16.msra.mxu0 %v2212
    %2294 = vmatpush.bf16.msra.mxu0 %v2211
    %2295 = vmatpush.bf16.msra.mxu0 %v2210
    %2296 = vmatpush.bf16.msra.mxu0 %v2209
    %2297 = vmatmul.bf16.gmra.mxu0 %v1962
    %v2298 = vpop.f32.mrf.mxu0
    %v2299 = vadd.f32 %v2047, %v2298
    %v2300 = vpop.f32.mrf.mxu0
    %2301 = vdwg.mxu0
    %2302 = vmatpush.bf16.msra.mxu0 %v2224
    %2303 = vmatpush.bf16.msra.mxu0 %v2223
    %2304 = vmatpush.bf16.msra.mxu0 %v2222
    %2305 = vmatpush.bf16.msra.mxu0 %v2221
    %2306 = vmatpush.bf16.msra.mxu0 %v2220
    %2307 = vmatpush.bf16.msra.mxu0 %v2219
    %2308 = vmatpush.bf16.msra.mxu0 %v2218
    %2309 = vmatpush.bf16.msra.mxu0 %v2217
    %2310 = vmatmul.bf16.gmra.mxu0 %v1963
    %v2311 = vpop.f32.mrf.mxu0
    %v2312 = vadd.f32 %v2299, %v2311
    %v2313 = vpop.f32.mrf.mxu0
    %2314 = vdwg.mxu0
    %2315 = vmatpush.bf16.msra.mxu0 %v2232
    %2316 = vmatpush.bf16.msra.mxu0 %v2231
    %2317 = vmatpush.bf16.msra.mxu0 %v2230
    %2318 = vmatpush.bf16.msra.mxu0 %v2229
    %2319 = vmatpush.bf16.msra.mxu0 %v2228
    %2320 = vmatpush.bf16.msra.mxu0 %v2227
    %2321 = vmatpush.bf16.msra.mxu0 %v2226
    %2322 = vmatpush.bf16.msra.mxu0 %v2225
    %2323 = vmatmul.bf16.gmra.mxu0 %v1964
    %v2324 = vpop.f32.mrf.mxu0
    %v2325 = vadd.f32 %v2312, %v2324
    %v2326 = vpop.f32.mrf.mxu0
    %2327 = vdwg.mxu0
    %2328 = vmatpush.bf16.msra.mxu0 %v2240
    %2329 = vmatpush.bf16.msra.mxu0 %v2239
    %2330 = vmatpush.bf16.msra.mxu0 %v2238
    %2331 = vmatpush.bf16.msra.mxu0 %v2237
    %2332 = vmatpush.bf16.msra.mxu0 %v2236
    %2333 = vmatpush.bf16.msra.mxu0 %v2235
    %2334 = vmatpush.bf16.msra.mxu0 %v2234
    %2335 = vmatpush.bf16.msra.mxu0 %v2233
    %2336 = vmatmul.bf16.gmra.mxu0 %v1551
    %v2337 = vpop.f32.mrf.mxu0
    %v2338 = vadd.f32 %v2325, %v2337
    %v2339 = vpop.f32.mrf.mxu0
    %2340 = vdwg.mxu0
    %2341 = vmatpush.bf16.msra.mxu0 %v2248
    %2342 = vmatpush.bf16.msra.mxu0 %v2247
    %2343 = vmatpush.bf16.msra.mxu0 %v2246
    %2344 = vmatpush.bf16.msra.mxu0 %v2245
    %2345 = vmatpush.bf16.msra.mxu0 %v2244
    %2346 = vmatpush.bf16.msra.mxu0 %v2243
    %2347 = vmatpush.bf16.msra.mxu0 %v2242
    %2348 = vmatpush.bf16.msra.mxu0 %v2241
    %2349 = vmatmul.bf16.gmra.mxu0 %v1552
    %v2350 = vpop.f32.mrf.mxu0
    %v2351 = vadd.f32 %v2338, %v2350
    %v2352 = vpop.f32.mrf.mxu0
    %2353 = vdwg.mxu0
    %v2357 = vrot.slane %v1550, 6
    %v2358 = vrot.slane %v2351, 4
    %vm2359 = vcmask 1041408
    %v2360 = vsel %vm2359, %v1549, %v2357
    %vm2361 = vcmask 1043456
    %v2362 = vsel %vm2361, %v2360, %v2358
    %2364 = vst [vmem:[%s7] sm:$0x3f] %v2362
    // Predicated region
    $region54: #{ideology_forward.1} parent=1 // pred_check
      _
    $region55: #{ideology_forward.1} parent=1 // pred_check_branch
      %2366 = sbr.rel (0) target = $region57
    $region56: #{ideology_forward.1} parent=1 // pred_region
      _
    $region57: #{ideology_forward.1} parent=1 // pred_fallthru
      _
    // Predicated region
    $region58: #{ideology_forward.1} parent=1 // pred_check
      _
    $region59: #{ideology_forward.1} parent=1 // pred_check_branch
      %2368 = sbr.rel (0) target = $region61
    $region60: #{ideology_forward.1} parent=1 // pred_region
      _
    $region61: #{ideology_forward.1} parent=1 // pred_fallthru
      _
    // Predicated region
    $region62: #{ideology_forward.1} parent=1 // pred_check
      _
    $region63: #{ideology_forward.1} parent=1 // pred_check_branch
      %2370 = sbr.rel (0) target = $region65
    $region64: #{ideology_forward.1} parent=1 // pred_region
      _
    $region65: #{ideology_forward.1} parent=1 // pred_fallthru
      _
    // Predicated region
    $region66: #{ideology_forward.1} parent=1 // pred_check
      _
    $region67: #{ideology_forward.1} parent=1 // pred_check_branch
      %2372 = sbr.rel (0) target = $region69
    $region68: #{ideology_forward.1} parent=1 // pred_region
      _
    $region69: #{ideology_forward.1} parent=1 // pred_fallthru
      _
    %2373 = vsyncpa [#allocation3], 1
    %2374 = vsyncpa [#allocation5], 1
    %2375 = vsyncpa [#allocation8], 1
    %2376 = vsyncpa [#allocation11], 1

</llo_original>
